<compile_context>
chip_gen: v7x
topology: tpu7x:2x2x1
jax: 0.10.0
libtpu: 0.0.40
codegen_flags: <defaults>
</compile_context>

<pallas_src>
import math
from functools import partial

import jax
import jax.numpy as jnp
from jax import lax
from jax.experimental import pallas as pl
from jax.experimental.pallas import tpu as pltpu

# ----------------------------- model config ---------------------------------
B = 2            # batch
S = 8            # sequence length
H = 32           # hidden size
NH = 4           # attention heads
HD = H // NH     # head dim
FF = 4 * H       # intermediate (FFN) size = 128
L = 2            # transformer layers
VOCAB = 100
TYPE_VOCAB = 2
MAX_POS = 16
NUM_LABELS = 3   # opt['label_size'] = "3"
LN_EPS = 1e-12   # BertLayerNorm eps
BS = B * S
LANE = 128
NEG_INF = -10000.0


# ------------------------------ Pallas kernel --------------------------------
def san_bert_kernel(
    emb_ref,        # [BS, H]    f32  word+pos+token_type embedding sum (pre-LN)
    bias_ref,       # [BS, BS]   f32  block-diagonal + key-padding additive bias
    w_a_ref,        # [L, 2H, 4H] bf16  rows 0:H = [wq|wk|wv|wo_attn], rows H:2H = w_ffn_in
    w_ffn_out_ref,  # [L, FF, H]  bf16
    vecs_ref,       # [L, 8, 128] f32  rows: bqkv, b_attn_out, ln1_g, ln1_b,
                    #                        b_ffn_in, b_ffn_out, ln2_g, ln2_b
    pooler_w_ref,   # [H, H]      bf16
    cls_w_ref,      # [H, 128]    bf16  (columns >= NUM_LABELS are zero padding)
    glob_ref,       # [4, 128]    f32  rows: emb_ln_g, emb_ln_b, pooler_b, cls_b
    seq_ref,        # out [BS, H]          f32  sequence_output (flattened)
    pooled_ref,     # out [B, H]           f32  pooled_output
    logits_ref,     # out [B, NUM_LABELS]  f32
    ctx_ref,        # scratch [BS, H] bf16  per-head context accumulator
):
    f32 = jnp.float32
    bf16 = jnp.bfloat16

    def layer_norm(x, g, b):
        mu = jnp.mean(x, axis=-1, keepdims=True)
        var = jnp.mean((x - mu) ** 2, axis=-1, keepdims=True)
        return (x - mu) * lax.rsqrt(var + LN_EPS) * g + b

    # TODO(synk): BERT's reference GELU is erf-based; the tanh approximation is
    # used to guarantee Mosaic lowering of the transcendental on all TPU gens.
    def gelu(x):
        c = 0.7978845608028654  # sqrt(2/pi)
        return 0.5 * x * (1.0 + jnp.tanh(c * (x + 0.044715 * x * x * x)))

    def softmax_last(x):
        m = jnp.max(x, axis=-1, keepdims=True)
        e = jnp.exp(x - m)
        return e * pl.reciprocal(jnp.sum(e, axis=-1, keepdims=True), approx=True)

    inv_sqrt_hd = 1.0 / math.sqrt(HD)

    bias = bias_ref[...]                                                 # [BS, BS]
    x = layer_norm(emb_ref[...], glob_ref[0:1, 0:H], glob_ref[1:2, 0:H])  # [BS, H] f32

    for l in range(L):  # tiny static layer loop (L=2); use grid=(L,) if L/H grow
        # One lane-dense [BS,H] x [H,4H] matmul: cols 0:3H = fused QKV, cols
        # 3H:4H (x @ wo_attn) are discarded -- keeping the weight 128-wide is
        # cheaper than a narrower MXU push + separate DMA for wo.
        w_top = w_a_ref[l, 0:H, :]                                       # [H, 4H] bf16
        xproj = jnp.dot(x.astype(bf16), w_top, preferred_element_type=f32)
        qkv = xproj[:, 0:3 * H] + vecs_ref[l, 0:1, 0:3 * H]              # [BS, 3H] f32

        for h in range(NH):  # static head loop; no transposes, no concatenations
            qh = qkv[:, h * HD:(h + 1) * HD].astype(bf16)
            kh = qkv[:, H + h * HD:H + (h + 1) * HD].astype(bf16)
            vh = qkv[:, 2 * H + h * HD:2 * H + (h + 1) * HD].astype(bf16)
            # Contract the last dims of both operands (no explicit kh.T).
            scores = lax.dot_general(qh, kh, (((1,), (1,)), ((), ())),
                                     preferred_element_type=f32)         # [BS, BS]
            scores = scores * inv_sqrt_hd + bias
            probs = softmax_last(scores)                                 # f32
            ctx_h = jnp.dot(probs.astype(bf16), vh, preferred_element_type=f32)
            ctx_ref[:, h * HD:(h + 1) * HD] = ctx_h.astype(bf16)

        w_o = w_a_ref[l, 0:H, 3 * H:4 * H]                               # [H, H] bf16
        attn_out = jnp.dot(ctx_ref[...], w_o, preferred_element_type=f32)
        attn_out = attn_out + vecs_ref[l, 1:2, 0:H]
        x = layer_norm(x + attn_out, vecs_ref[l, 2:3, 0:H], vecs_ref[l, 3:4, 0:H])

        w_i = w_a_ref[l, H:2 * H, :]                                     # [H, FF] bf16
        inter = gelu(jnp.dot(x.astype(bf16), w_i, preferred_element_type=f32)
                     + vecs_ref[l, 4:5, :])                              # [BS, FF] f32
        ffn_out = jnp.dot(inter.astype(bf16), w_ffn_out_ref[l],
                          preferred_element_type=f32) + vecs_ref[l, 5:6, 0:H]
        x = layer_norm(x + ffn_out, vecs_ref[l, 6:7, 0:H], vecs_ref[l, 7:8, 0:H])

    seq_ref[...] = x

    # BERT pooler (Linear + tanh on token 0 of each sequence) + task head.
    first = jnp.concatenate([x[b * S:b * S + 1, :] for b in range(B)], axis=0)  # [B, H]
    pooled = jnp.tanh(jnp.dot(first.astype(bf16), pooler_w_ref[...],
                              preferred_element_type=f32) + glob_ref[2:3, 0:H])
    pooled_ref[...] = pooled

    # cls_pooling == 'CLS', dropout identity (eval). cls_w is zero-padded to 128
    # lanes so the MXU op stays lane-dense; extra columns are sliced away.
    logits_full = jnp.dot(pooled.astype(bf16), cls_w_ref[...],
                          preferred_element_type=f32)                    # [B, 128]
    logits_ref[...] = logits_full[:, 0:NUM_LABELS] + glob_ref[3:4, 0:NUM_LABELS]


# --------------------------- host-side param packing -------------------------
def pack_params(p):
    bf16 = jnp.bfloat16

    def pad_lane(v):  # [L, n] -> [L, 128]
        return jnp.pad(v, ((0, 0), (0, LANE - v.shape[-1])))

    # Weight slab: per layer, rows 0:H = [wq|wk|wv|wo_attn] (4H = 128 lanes),
    # rows H:2H = FFN intermediate weight. Stored bf16 for the MXU.
    top = jnp.concatenate([p["wq"], p["wk"], p["wv"], p["wo"]], axis=-1)  # [L,H,4H]
    w_a = jnp.concatenate([top, p["wi"]], axis=1).astype(bf16)            # [L,2H,4H]
    w_ffn_out = p["wo2"].astype(bf16)                                     # [L,FF,H]

    # All per-layer biases / LayerNorm params in one lane-padded f32 slab.
    vecs = jnp.stack([
        pad_lane(jnp.concatenate([p["bq"], p["bk"], p["bv"]], axis=-1)),  # bqkv
        pad_lane(p["bo"]), pad_lane(p["ln1_g"]), pad_lane(p["ln1_b"]),
        pad_lane(p["bi"]), pad_lane(p["bo2"]),
        pad_lane(p["ln2_g"]), pad_lane(p["ln2_b"]),
    ], axis=1).astype(jnp.float32)                                        # [L,8,128]

    glob = jnp.stack([
        jnp.pad(p["emb_ln_g"], (0, LANE - H)),
        jnp.pad(p["emb_ln_b"], (0, LANE - H)),
        jnp.pad(p["pooler_b"], (0, LANE - H)),
        jnp.pad(p["cls_b"], (0, LANE - NUM_LABELS)),
    ], axis=0).astype(jnp.float32)                                        # [4,128]

    pooler_w = p["pooler_w"].astype(bf16)                                 # [H,H]
    cls_w = jnp.pad(p["cls_w"], ((0, 0), (0, LANE - NUM_LABELS))).astype(bf16)
    return w_a, w_ffn_out, vecs, pooler_w, cls_w, glob


# ------------------------------ wrapper --------------------------------------
def san_bert_forward(params, input_ids, token_type_ids, attention_mask):
    """Full forward pass; embedding gathers + packing are glue, rest is Pallas."""
    w_a, w_ffn_out, vecs, pooler_w, cls_w, glob = pack_params(params)

    # Embedding lookups (gather == glue; sum stays exact vs. PyTorch).
    word = jnp.take(params["word_emb"], input_ids, axis=0)           # [B,S,H]
    pos = jnp.take(params["pos_emb"], jnp.arange(S), axis=0)[None]   # [1,S,H]
    tok = jnp.take(params["tok_emb"], token_type_ids, axis=0)        # [B,S,H]
    emb2d = (word + pos + tok).astype(jnp.float32).reshape(BS, H)

    # Block-diagonal additive attention bias: folds the batch into one
    # [B*S, B*S] score matrix while reproducing BERT's (1-mask)*-10000 key
    # padding exactly (cross-batch blocks are fully masked).
    key_keep = attention_mask.astype(jnp.float32).reshape(BS)
    batch_id = jnp.repeat(jnp.arange(B), S)
    allowed = (batch_id[:, None] == batch_id[None, :]) & (key_keep[None, :] > 0.5)
    attn_bias = jnp.where(allowed, 0.0, NEG_INF).astype(jnp.float32)  # [BS,BS]

    vmem = pl.BlockSpec(memory_space=pltpu.MemorySpace.VMEM)
    kernel_inputs = (emb2d, attn_bias, w_a, w_ffn_out, vecs, pooler_w, cls_w, glob)

    out_shape = (
        jax.ShapeDtypeStruct((BS, H), jnp.float32),           # sequence_output (flat)
        jax.ShapeDtypeStruct((B, H), jnp.float32),            # pooled_output
        jax.ShapeDtypeStruct((B, NUM_LABELS), jnp.float32),   # logits
    )

    seq2d, pooled, logits = pl.pallas_call(
        san_bert_kernel,
        out_shape=out_shape,
        in_specs=[vmem] * len(kernel_inputs),
        out_specs=(vmem, vmem, vmem),
        scratch_shapes=[pltpu.VMEM((BS, H), jnp.bfloat16)],
        compiler_params=pltpu.CompilerParams(vmem_limit_bytes=8 << 20),
    )(*kernel_inputs)
    return seq2d.reshape(B, S, H), pooled, logits


# --------------------------- deterministic params ----------------------------
def make_params(key):
    std = 0.02  # 0.02 * init_ratio (init_ratio = 1)
    keys = iter(jax.random.split(key, 64))

    def lin_w(shape):
        return std * jax.random.normal(next(keys), shape, dtype=jnp.float32)

    p = {}
    p["word_emb"] = lin_w((VOCAB, H))
    p["pos_emb"] = lin_w((MAX_POS, H))
    p["tok_emb"] = lin_w((TYPE_VOCAB, H))
    p["emb_ln_g"] = jnp.ones((H,), jnp.float32)
    p["emb_ln_b"] = jnp.zeros((H,), jnp.float32)

    p["wq"] = lin_w((L, H, H)); p["bq"] = jnp.zeros((L, H), jnp.float32)
    p["wk"] = lin_w((L, H, H)); p["bk"] = jnp.zeros((L, H), jnp.float32)
    p["wv"] = lin_w((L, H, H)); p["bv"] = jnp.zeros((L, H), jnp.float32)
    p["wo"] = lin_w((L, H, H)); p["bo"] = jnp.zeros((L, H), jnp.float32)
    p["ln1_g"] = jnp.ones((L, H), jnp.float32)
    p["ln1_b"] = jnp.zeros((L, H), jnp.float32)
    p["wi"] = lin_w((L, H, FF)); p["bi"] = jnp.zeros((L, FF), jnp.float32)
    p["wo2"] = lin_w((L, FF, H)); p["bo2"] = jnp.zeros((L, H), jnp.float32)
    p["ln2_g"] = jnp.ones((L, H), jnp.float32)
    p["ln2_b"] = jnp.zeros((L, H), jnp.float32)

    p["pooler_w"] = lin_w((H, H))
    p["pooler_b"] = jnp.zeros((H,), jnp.float32)
    p["cls_w"] = lin_w((H, NUM_LABELS))
    p["cls_b"] = jnp.zeros((NUM_LABELS,), jnp.float32)
    return p


# --------------------------------- main ---------------------------------------
if __name__ == "__main__":
    root = jax.random.PRNGKey(0)
    k_param, k_ids = jax.random.split(root)

    params = make_params(k_param)

    input_ids = jax.random.randint(k_ids, (B, S), 0, VOCAB, dtype=jnp.int32)
    token_type_ids = jnp.zeros((B, S), dtype=jnp.int32)
    # mask out the last two positions of the second example to exercise masking
    attention_mask = jnp.ones((B, S), dtype=jnp.int32)
    attention_mask = attention_mask.at[1, -2:].set(0)

    fwd = jax.jit(partial(san_bert_forward, params))
    seq_out, pooled, logits = fwd(input_ids, token_type_ids, attention_mask)
    jax.block_until_ready((seq_out, pooled, logits))

    assert seq_out.shape == (B, S, H)
    assert pooled.shape == (B, H)
    assert logits.shape == (B, NUM_LABELS)
    assert bool(jnp.all(jnp.isfinite(seq_out)))
    assert bool(jnp.all(jnp.isfinite(pooled)))
    assert bool(jnp.all(jnp.isfinite(logits)))

    print("KERNEL_OK")
</pallas_src>

<mosaic_0001>
module attributes {stable_mosaic.version = 11 : i64} {
  func.func @san_bert_kernel(%arg0: memref<16x32xf32, #tpu.memory_space<vmem>>, %arg1: memref<16x16xf32, #tpu.memory_space<vmem>>, %arg2: memref<2x64x128xbf16, #tpu.memory_space<vmem>>, %arg3: memref<2x128x32xbf16, #tpu.memory_space<vmem>>, %arg4: memref<2x8x128xf32, #tpu.memory_space<vmem>>, %arg5: memref<32x32xbf16, #tpu.memory_space<vmem>>, %arg6: memref<32x128xbf16, #tpu.memory_space<vmem>>, %arg7: memref<4x128xf32, #tpu.memory_space<vmem>>, %arg8: memref<16x32xf32, #tpu.memory_space<vmem>>, %arg9: memref<2x32xf32, #tpu.memory_space<vmem>>, %arg10: memref<2x3xf32, #tpu.memory_space<vmem>>, %arg11: memref<16x32xbf16, #tpu.memory_space<vmem>>) attributes {dimension_semantics = [], scalar_prefetch = 0 : i64, scratch_operands = 1 : i64, tpu.core_type = #tpu.core_type<tc>} {
    %c0 = arith.constant 0 : index
    %c0_0 = arith.constant 0 : index
    %0 = vector.load %arg1[%c0, %c0_0] : memref<16x16xf32, #tpu.memory_space<vmem>>, vector<16x16xf32>
    %c0_1 = arith.constant 0 : index
    %c0_2 = arith.constant 0 : index
    %1 = vector.load %arg0[%c0_1, %c0_2] : memref<16x32xf32, #tpu.memory_space<vmem>>, vector<16x32xf32>
    %c0_3 = arith.constant 0 : index
    %c0_4 = arith.constant 0 : index
    %2 = vector.load %arg7[%c0_3, %c0_4] : memref<4x128xf32, #tpu.memory_space<vmem>>, vector<1x32xf32>
    %c1 = arith.constant 1 : index
    %c0_5 = arith.constant 0 : index
    %3 = vector.load %arg7[%c1, %c0_5] : memref<4x128xf32, #tpu.memory_space<vmem>>, vector<1x32xf32>
    %cst = arith.constant dense<0.000000e+00> : vector<16xf32>
    %4 = vector.multi_reduction <add>, %1, %cst [1] : vector<16x32xf32> to vector<16xf32>
    %5 = vector.shape_cast %4 : vector<16xf32> to vector<16x1xf32>
    %cst_6 = arith.constant 3.200000e+01 : f32
    %6 = vector.broadcast %cst_6 : f32 to vector<16x1xf32>
    %7 = arith.divf %5, %6 : vector<16x1xf32>
    %8 = vector.broadcast %7 : vector<16x1xf32> to vector<16x32xf32>
    %9 = arith.subf %1, %8 : vector<16x32xf32>
    %10 = arith.mulf %9, %9 : vector<16x32xf32>
    %cst_7 = arith.constant dense<0.000000e+00> : vector<16xf32>
    %11 = vector.multi_reduction <add>, %10, %cst_7 [1] : vector<16x32xf32> to vector<16xf32>
    %12 = vector.shape_cast %11 : vector<16xf32> to vector<16x1xf32>
    %cst_8 = arith.constant 3.200000e+01 : f32
    %13 = vector.broadcast %cst_8 : f32 to vector<16x1xf32>
    %14 = arith.divf %12, %13 : vector<16x1xf32>
    %15 = vector.broadcast %7 : vector<16x1xf32> to vector<16x32xf32>
    %16 = arith.subf %1, %15 : vector<16x32xf32>
    %cst_9 = arith.constant 9.99999996E-13 : f32
    %17 = vector.broadcast %cst_9 : f32 to vector<16x1xf32>
    %18 = arith.addf %14, %17 : vector<16x1xf32>
    %19 = math.rsqrt %18 : vector<16x1xf32>
    %20 = vector.broadcast %19 : vector<16x1xf32> to vector<16x32xf32>
    %21 = arith.mulf %16, %20 : vector<16x32xf32>
    %22 = vector.broadcast %2 : vector<1x32xf32> to vector<16x32xf32>
    %23 = arith.mulf %21, %22 : vector<16x32xf32>
    %24 = vector.broadcast %3 : vector<1x32xf32> to vector<16x32xf32>
    %25 = arith.addf %23, %24 : vector<16x32xf32>
    %c0_10 = arith.constant 0 : index
    %c0_11 = arith.constant 0 : index
    %c0_12 = arith.constant 0 : index
    %26 = vector.load %arg2[%c0_10, %c0_11, %c0_12] : memref<2x64x128xbf16, #tpu.memory_space<vmem>>, vector<1x32x128xbf16>
    %27 = vector.shape_cast %26 : vector<1x32x128xbf16> to vector<32x128xbf16>
    %28 = arith.truncf %25 : vector<16x32xf32> to vector<16x32xbf16>
    %cst_13 = arith.constant dense<0.000000e+00> : vector<16x128xf32>
    %29 = tpu.matmul %28, %27, %cst_13 {dimension_numbers = #tpu.dot_dimension_numbers<[1], [0], [0], [1], [0, 0, 1, 1], [], []>} : vector<16x32xbf16>, vector<32x128xbf16>, vector<16x128xf32> -> vector<16x128xf32>
    %30 = vector.extract_strided_slice %29 {offsets = [0, 0], sizes = [16, 96], strides = [1, 1]} : vector<16x128xf32> to vector<16x96xf32>
    %c0_14 = arith.constant 0 : index
    %c0_15 = arith.constant 0 : index
    %c0_16 = arith.constant 0 : index
    %31 = vector.load %arg4[%c0_14, %c0_15, %c0_16] : memref<2x8x128xf32, #tpu.memory_space<vmem>>, vector<1x1x96xf32>
    %32 = vector.shape_cast %31 : vector<1x1x96xf32> to vector<1x96xf32>
    %33 = vector.broadcast %32 : vector<1x96xf32> to vector<16x96xf32>
    %34 = arith.addf %30, %33 : vector<16x96xf32>
    %35 = vector.extract_strided_slice %34 {offsets = [0, 0], sizes = [16, 8], strides = [1, 1]} : vector<16x96xf32> to vector<16x8xf32>
    %36 = arith.truncf %35 : vector<16x8xf32> to vector<16x8xbf16>
    %37 = vector.extract_strided_slice %34 {offsets = [0, 32], sizes = [16, 8], strides = [1, 1]} : vector<16x96xf32> to vector<16x8xf32>
    %38 = arith.truncf %37 : vector<16x8xf32> to vector<16x8xbf16>
    %39 = vector.extract_strided_slice %34 {offsets = [0, 64], sizes = [16, 8], strides = [1, 1]} : vector<16x96xf32> to vector<16x8xf32>
    %40 = arith.truncf %39 : vector<16x8xf32> to vector<16x8xbf16>
    %cst_17 = arith.constant dense<0.000000e+00> : vector<16x16xf32>
    %41 = tpu.matmul %36, %38, %cst_17 {dimension_numbers = #tpu.dot_dimension_numbers<[1], [1], [0], [0], [0, 0, 1, 0], [], []>} : vector<16x8xbf16>, vector<16x8xbf16>, vector<16x16xf32> -> vector<16x16xf32>
    %cst_18 = arith.constant 0.353553385 : f32
    %42 = vector.broadcast %cst_18 : f32 to vector<16x16xf32>
    %43 = arith.mulf %41, %42 : vector<16x16xf32>
    %44 = arith.addf %43, %0 : vector<16x16xf32>
    %cst_19 = arith.constant dense<0xFF800000> : vector<16xf32>
    %45 = vector.multi_reduction <maximumf>, %44, %cst_19 [1] : vector<16x16xf32> to vector<16xf32>
    %46 = vector.shape_cast %45 : vector<16xf32> to vector<16x1xf32>
    %47 = vector.broadcast %46 : vector<16x1xf32> to vector<16x16xf32>
    %48 = arith.subf %44, %47 : vector<16x16xf32>
    %49 = math.exp %48 : vector<16x16xf32>
    %cst_20 = arith.constant dense<0.000000e+00> : vector<16xf32>
    %50 = vector.multi_reduction <add>, %49, %cst_20 [1] : vector<16x16xf32> to vector<16xf32>
    %51 = vector.shape_cast %50 : vector<16xf32> to vector<16x1xf32>
    %52 = tpu.reciprocal %51 {approx = true} : vector<16x1xf32> -> vector<16x1xf32>
    %53 = vector.broadcast %52 : vector<16x1xf32> to vector<16x16xf32>
    %54 = arith.mulf %49, %53 : vector<16x16xf32>
    %55 = arith.truncf %54 : vector<16x16xf32> to vector<16x16xbf16>
    %cst_21 = arith.constant dense<0.000000e+00> : vector<16x8xf32>
    %56 = tpu.matmul %55, %40, %cst_21 {dimension_numbers = #tpu.dot_dimension_numbers<[1], [0], [0], [1], [0, 0, 1, 1], [], []>} : vector<16x16xbf16>, vector<16x8xbf16>, vector<16x8xf32> -> vector<16x8xf32>
    %57 = arith.truncf %56 : vector<16x8xf32> to vector<16x8xbf16>
    %c0_22 = arith.constant 0 : index
    %c0_23 = arith.constant 0 : index
    %58 = vector.load %arg11[%c0_22, %c0_23] : memref<16x32xbf16, #tpu.memory_space<vmem>>, vector<16x8xbf16>
    tpu.vector_store %arg11[%c0_22, %c0_23], %57 {strides = array<i32>} : memref<16x32xbf16, #tpu.memory_space<vmem>>, vector<16x8xbf16>,
    %59 = vector.extract_strided_slice %34 {offsets = [0, 8], sizes = [16, 8], strides = [1, 1]} : vector<16x96xf32> to vector<16x8xf32>
    %60 = arith.truncf %59 : vector<16x8xf32> to vector<16x8xbf16>
    %61 = vector.extract_strided_slice %34 {offsets = [0, 40], sizes = [16, 8], strides = [1, 1]} : vector<16x96xf32> to vector<16x8xf32>
    %62 = arith.truncf %61 : vector<16x8xf32> to vector<16x8xbf16>
    %63 = vector.extract_strided_slice %34 {offsets = [0, 72], sizes = [16, 8], strides = [1, 1]} : vector<16x96xf32> to vector<16x8xf32>
    %64 = arith.truncf %63 : vector<16x8xf32> to vector<16x8xbf16>
    %cst_24 = arith.constant dense<0.000000e+00> : vector<16x16xf32>
    %65 = tpu.matmul %60, %62, %cst_24 {dimension_numbers = #tpu.dot_dimension_numbers<[1], [1], [0], [0], [0, 0, 1, 0], [], []>} : vector<16x8xbf16>, vector<16x8xbf16>, vector<16x16xf32> -> vector<16x16xf32>
    %cst_25 = arith.constant 0.353553385 : f32
    %66 = vector.broadcast %cst_25 : f32 to vector<16x16xf32>
    %67 = arith.mulf %65, %66 : vector<16x16xf32>
    %68 = arith.addf %67, %0 : vector<16x16xf32>
    %cst_26 = arith.constant dense<0xFF800000> : vector<16xf32>
    %69 = vector.multi_reduction <maximumf>, %68, %cst_26 [1] : vector<16x16xf32> to vector<16xf32>
    %70 = vector.shape_cast %69 : vector<16xf32> to vector<16x1xf32>
    %71 = vector.broadcast %70 : vector<16x1xf32> to vector<16x16xf32>
    %72 = arith.subf %68, %71 : vector<16x16xf32>
    %73 = math.exp %72 : vector<16x16xf32>
    %cst_27 = arith.constant dense<0.000000e+00> : vector<16xf32>
    %74 = vector.multi_reduction <add>, %73, %cst_27 [1] : vector<16x16xf32> to vector<16xf32>
    %75 = vector.shape_cast %74 : vector<16xf32> to vector<16x1xf32>
    %76 = tpu.reciprocal %75 {approx = true} : vector<16x1xf32> -> vector<16x1xf32>
    %77 = vector.broadcast %76 : vector<16x1xf32> to vector<16x16xf32>
    %78 = arith.mulf %73, %77 : vector<16x16xf32>
    %79 = arith.truncf %78 : vector<16x16xf32> to vector<16x16xbf16>
    %cst_28 = arith.constant dense<0.000000e+00> : vector<16x8xf32>
    %80 = tpu.matmul %79, %64, %cst_28 {dimension_numbers = #tpu.dot_dimension_numbers<[1], [0], [0], [1], [0, 0, 1, 1], [], []>} : vector<16x16xbf16>, vector<16x8xbf16>, vector<16x8xf32> -> vector<16x8xf32>
    %81 = arith.truncf %80 : vector<16x8xf32> to vector<16x8xbf16>
    %c0_29 = arith.constant 0 : index
    %c8 = arith.constant 8 : index
    %82 = vector.load %arg11[%c0_29, %c8] : memref<16x32xbf16, #tpu.memory_space<vmem>>, vector<16x8xbf16>
    tpu.vector_store %arg11[%c0_29, %c8], %81 {strides = array<i32>} : memref<16x32xbf16, #tpu.memory_space<vmem>>, vector<16x8xbf16>,
    %83 = vector.extract_strided_slice %34 {offsets = [0, 16], sizes = [16, 8], strides = [1, 1]} : vector<16x96xf32> to vector<16x8xf32>
    %84 = arith.truncf %83 : vector<16x8xf32> to vector<16x8xbf16>
    %85 = vector.extract_strided_slice %34 {offsets = [0, 48], sizes = [16, 8], strides = [1, 1]} : vector<16x96xf32> to vector<16x8xf32>
    %86 = arith.truncf %85 : vector<16x8xf32> to vector<16x8xbf16>
    %87 = vector.extract_strided_slice %34 {offsets = [0, 80], sizes = [16, 8], strides = [1, 1]} : vector<16x96xf32> to vector<16x8xf32>
    %88 = arith.truncf %87 : vector<16x8xf32> to vector<16x8xbf16>
    %cst_30 = arith.constant dense<0.000000e+00> : vector<16x16xf32>
    %89 = tpu.matmul %84, %86, %cst_30 {dimension_numbers = #tpu.dot_dimension_numbers<[1], [1], [0], [0], [0, 0, 1, 0], [], []>} : vector<16x8xbf16>, vector<16x8xbf16>, vector<16x16xf32> -> vector<16x16xf32>
    %cst_31 = arith.constant 0.353553385 : f32
    %90 = vector.broadcast %cst_31 : f32 to vector<16x16xf32>
    %91 = arith.mulf %89, %90 : vector<16x16xf32>
    %92 = arith.addf %91, %0 : vector<16x16xf32>
    %cst_32 = arith.constant dense<0xFF800000> : vector<16xf32>
    %93 = vector.multi_reduction <maximumf>, %92, %cst_32 [1] : vector<16x16xf32> to vector<16xf32>
    %94 = vector.shape_cast %93 : vector<16xf32> to vector<16x1xf32>
    %95 = vector.broadcast %94 : vector<16x1xf32> to vector<16x16xf32>
    %96 = arith.subf %92, %95 : vector<16x16xf32>
    %97 = math.exp %96 : vector<16x16xf32>
    %cst_33 = arith.constant dense<0.000000e+00> : vector<16xf32>
    %98 = vector.multi_reduction <add>, %97, %cst_33 [1] : vector<16x16xf32> to vector<16xf32>
    %99 = vector.shape_cast %98 : vector<16xf32> to vector<16x1xf32>
    %100 = tpu.reciprocal %99 {approx = true} : vector<16x1xf32> -> vector<16x1xf32>
    %101 = vector.broadcast %100 : vector<16x1xf32> to vector<16x16xf32>
    %102 = arith.mulf %97, %101 : vector<16x16xf32>
    %103 = arith.truncf %102 : vector<16x16xf32> to vector<16x16xbf16>
    %cst_34 = arith.constant dense<0.000000e+00> : vector<16x8xf32>
    %104 = tpu.matmul %103, %88, %cst_34 {dimension_numbers = #tpu.dot_dimension_numbers<[1], [0], [0], [1], [0, 0, 1, 1], [], []>} : vector<16x16xbf16>, vector<16x8xbf16>, vector<16x8xf32> -> vector<16x8xf32>
    %105 = arith.truncf %104 : vector<16x8xf32> to vector<16x8xbf16>
    %c0_35 = arith.constant 0 : index
    %c16 = arith.constant 16 : index
    %106 = vector.load %arg11[%c0_35, %c16] : memref<16x32xbf16, #tpu.memory_space<vmem>>, vector<16x8xbf16>
    tpu.vector_store %arg11[%c0_35, %c16], %105 {strides = array<i32>} : memref<16x32xbf16, #tpu.memory_space<vmem>>, vector<16x8xbf16>,
    %107 = vector.extract_strided_slice %34 {offsets = [0, 24], sizes = [16, 8], strides = [1, 1]} : vector<16x96xf32> to vector<16x8xf32>
    %108 = arith.truncf %107 : vector<16x8xf32> to vector<16x8xbf16>
    %109 = vector.extract_strided_slice %34 {offsets = [0, 56], sizes = [16, 8], strides = [1, 1]} : vector<16x96xf32> to vector<16x8xf32>
    %110 = arith.truncf %109 : vector<16x8xf32> to vector<16x8xbf16>
    %111 = vector.extract_strided_slice %34 {offsets = [0, 88], sizes = [16, 8], strides = [1, 1]} : vector<16x96xf32> to vector<16x8xf32>
    %112 = arith.truncf %111 : vector<16x8xf32> to vector<16x8xbf16>
    %cst_36 = arith.constant dense<0.000000e+00> : vector<16x16xf32>
    %113 = tpu.matmul %108, %110, %cst_36 {dimension_numbers = #tpu.dot_dimension_numbers<[1], [1], [0], [0], [0, 0, 1, 0], [], []>} : vector<16x8xbf16>, vector<16x8xbf16>, vector<16x16xf32> -> vector<16x16xf32>
    %cst_37 = arith.constant 0.353553385 : f32
    %114 = vector.broadcast %cst_37 : f32 to vector<16x16xf32>
    %115 = arith.mulf %113, %114 : vector<16x16xf32>
    %116 = arith.addf %115, %0 : vector<16x16xf32>
    %cst_38 = arith.constant dense<0xFF800000> : vector<16xf32>
    %117 = vector.multi_reduction <maximumf>, %116, %cst_38 [1] : vector<16x16xf32> to vector<16xf32>
    %118 = vector.shape_cast %117 : vector<16xf32> to vector<16x1xf32>
    %119 = vector.broadcast %118 : vector<16x1xf32> to vector<16x16xf32>
    %120 = arith.subf %116, %119 : vector<16x16xf32>
    %121 = math.exp %120 : vector<16x16xf32>
    %cst_39 = arith.constant dense<0.000000e+00> : vector<16xf32>
    %122 = vector.multi_reduction <add>, %121, %cst_39 [1] : vector<16x16xf32> to vector<16xf32>
    %123 = vector.shape_cast %122 : vector<16xf32> to vector<16x1xf32>
    %124 = tpu.reciprocal %123 {approx = true} : vector<16x1xf32> -> vector<16x1xf32>
    %125 = vector.broadcast %124 : vector<16x1xf32> to vector<16x16xf32>
    %126 = arith.mulf %121, %125 : vector<16x16xf32>
    %127 = arith.truncf %126 : vector<16x16xf32> to vector<16x16xbf16>
    %cst_40 = arith.constant dense<0.000000e+00> : vector<16x8xf32>
    %128 = tpu.matmul %127, %112, %cst_40 {dimension_numbers = #tpu.dot_dimension_numbers<[1], [0], [0], [1], [0, 0, 1, 1], [], []>} : vector<16x16xbf16>, vector<16x8xbf16>, vector<16x8xf32> -> vector<16x8xf32>
    %129 = arith.truncf %128 : vector<16x8xf32> to vector<16x8xbf16>
    %c0_41 = arith.constant 0 : index
    %c24 = arith.constant 24 : index
    %130 = vector.load %arg11[%c0_41, %c24] : memref<16x32xbf16, #tpu.memory_space<vmem>>, vector<16x8xbf16>
    tpu.vector_store %arg11[%c0_41, %c24], %129 {strides = array<i32>} : memref<16x32xbf16, #tpu.memory_space<vmem>>, vector<16x8xbf16>,
    %c0_42 = arith.constant 0 : index
    %c0_43 = arith.constant 0 : index
    %c96 = arith.constant 96 : index
    %131 = vector.load %arg2[%c0_42, %c0_43, %c96] : memref<2x64x128xbf16, #tpu.memory_space<vmem>>, vector<1x32x32xbf16>
    %132 = vector.shape_cast %131 : vector<1x32x32xbf16> to vector<32x32xbf16>
    %c0_44 = arith.constant 0 : index
    %c0_45 = arith.constant 0 : index
    %133 = vector.load %arg11[%c0_44, %c0_45] : memref<16x32xbf16, #tpu.memory_space<vmem>>, vector<16x32xbf16>
    %cst_46 = arith.constant dense<0.000000e+00> : vector<16x32xf32>
    %134 = tpu.matmul %133, %132, %cst_46 {dimension_numbers = #tpu.dot_dimension_numbers<[1], [0], [0], [1], [0, 0, 1, 1], [], []>} : vector<16x32xbf16>, vector<32x32xbf16>, vector<16x32xf32> -> vector<16x32xf32>
    %c0_47 = arith.constant 0 : index
    %c1_48 = arith.constant 1 : index
    %c0_49 = arith.constant 0 : index
    %135 = vector.load %arg4[%c0_47, %c1_48, %c0_49] : memref<2x8x128xf32, #tpu.memory_space<vmem>>, vector<1x1x32xf32>
    %136 = vector.shape_cast %135 : vector<1x1x32xf32> to vector<1x32xf32>
    %137 = vector.broadcast %136 : vector<1x32xf32> to vector<16x32xf32>
    %138 = arith.addf %134, %137 : vector<16x32xf32>
    %139 = arith.addf %25, %138 : vector<16x32xf32>
    %c0_50 = arith.constant 0 : index
    %c2 = arith.constant 2 : index
    %c0_51 = arith.constant 0 : index
    %140 = vector.load %arg4[%c0_50, %c2, %c0_51] : memref<2x8x128xf32, #tpu.memory_space<vmem>>, vector<1x1x32xf32>
    %141 = vector.shape_cast %140 : vector<1x1x32xf32> to vector<1x32xf32>
    %c0_52 = arith.constant 0 : index
    %c3 = arith.constant 3 : index
    %c0_53 = arith.constant 0 : index
    %142 = vector.load %arg4[%c0_52, %c3, %c0_53] : memref<2x8x128xf32, #tpu.memory_space<vmem>>, vector<1x1x32xf32>
    %143 = vector.shape_cast %142 : vector<1x1x32xf32> to vector<1x32xf32>
    %cst_54 = arith.constant dense<0.000000e+00> : vector<16xf32>
    %144 = vector.multi_reduction <add>, %139, %cst_54 [1] : vector<16x32xf32> to vector<16xf32>
    %145 = vector.shape_cast %144 : vector<16xf32> to vector<16x1xf32>
    %cst_55 = arith.constant 3.200000e+01 : f32
    %146 = vector.broadcast %cst_55 : f32 to vector<16x1xf32>
    %147 = arith.divf %145, %146 : vector<16x1xf32>
    %148 = vector.broadcast %147 : vector<16x1xf32> to vector<16x32xf32>
    %149 = arith.subf %139, %148 : vector<16x32xf32>
    %150 = arith.mulf %149, %149 : vector<16x32xf32>
    %cst_56 = arith.constant dense<0.000000e+00> : vector<16xf32>
    %151 = vector.multi_reduction <add>, %150, %cst_56 [1] : vector<16x32xf32> to vector<16xf32>
    %152 = vector.shape_cast %151 : vector<16xf32> to vector<16x1xf32>
    %cst_57 = arith.constant 3.200000e+01 : f32
    %153 = vector.broadcast %cst_57 : f32 to vector<16x1xf32>
    %154 = arith.divf %152, %153 : vector<16x1xf32>
    %155 = vector.broadcast %147 : vector<16x1xf32> to vector<16x32xf32>
    %156 = arith.subf %139, %155 : vector<16x32xf32>
    %cst_58 = arith.constant 9.99999996E-13 : f32
    %157 = vector.broadcast %cst_58 : f32 to vector<16x1xf32>
    %158 = arith.addf %154, %157 : vector<16x1xf32>
    %159 = math.rsqrt %158 : vector<16x1xf32>
    %160 = vector.broadcast %159 : vector<16x1xf32> to vector<16x32xf32>
    %161 = arith.mulf %156, %160 : vector<16x32xf32>
    %162 = vector.broadcast %141 : vector<1x32xf32> to vector<16x32xf32>
    %163 = arith.mulf %161, %162 : vector<16x32xf32>
    %164 = vector.broadcast %143 : vector<1x32xf32> to vector<16x32xf32>
    %165 = arith.addf %163, %164 : vector<16x32xf32>
    %c0_59 = arith.constant 0 : index
    %c32 = arith.constant 32 : index
    %c0_60 = arith.constant 0 : index
    %166 = vector.load %arg2[%c0_59, %c32, %c0_60] : memref<2x64x128xbf16, #tpu.memory_space<vmem>>, vector<1x32x128xbf16>
    %167 = vector.shape_cast %166 : vector<1x32x128xbf16> to vector<32x128xbf16>
    %168 = arith.truncf %165 : vector<16x32xf32> to vector<16x32xbf16>
    %cst_61 = arith.constant dense<0.000000e+00> : vector<16x128xf32>
    %169 = tpu.matmul %168, %167, %cst_61 {dimension_numbers = #tpu.dot_dimension_numbers<[1], [0], [0], [1], [0, 0, 1, 1], [], []>} : vector<16x32xbf16>, vector<32x128xbf16>, vector<16x128xf32> -> vector<16x128xf32>
    %c0_62 = arith.constant 0 : index
    %c4 = arith.constant 4 : index
    %c0_63 = arith.constant 0 : index
    %170 = vector.load %arg4[%c0_62, %c4, %c0_63] : memref<2x8x128xf32, #tpu.memory_space<vmem>>, vector<1x1x128xf32>
    %171 = vector.shape_cast %170 : vector<1x1x128xf32> to vector<1x128xf32>
    %172 = vector.broadcast %171 : vector<1x128xf32> to vector<16x128xf32>
    %173 = arith.addf %169, %172 : vector<16x128xf32>
    %cst_64 = arith.constant 5.000000e-01 : f32
    %174 = vector.broadcast %cst_64 : f32 to vector<16x128xf32>
    %175 = arith.mulf %174, %173 : vector<16x128xf32>
    %cst_65 = arith.constant 4.471500e-02 : f32
    %176 = vector.broadcast %cst_65 : f32 to vector<16x128xf32>
    %177 = arith.mulf %176, %173 : vector<16x128xf32>
    %178 = arith.mulf %177, %173 : vector<16x128xf32>
    %179 = arith.mulf %178, %173 : vector<16x128xf32>
    %180 = arith.addf %173, %179 : vector<16x128xf32>
    %cst_66 = arith.constant 0.797884583 : f32
    %181 = vector.broadcast %cst_66 : f32 to vector<16x128xf32>
    %182 = arith.mulf %181, %180 : vector<16x128xf32>
    %183 = math.tanh %182 : vector<16x128xf32>
    %cst_67 = arith.constant 1.000000e+00 : f32
    %184 = vector.broadcast %cst_67 : f32 to vector<16x128xf32>
    %185 = arith.addf %184, %183 : vector<16x128xf32>
    %186 = arith.mulf %175, %185 : vector<16x128xf32>
    %187 = arith.truncf %186 : vector<16x128xf32> to vector<16x128xbf16>
    %c0_68 = arith.constant 0 : index
    %c0_69 = arith.constant 0 : index
    %c0_70 = arith.constant 0 : index
    %188 = vector.load %arg3[%c0_68, %c0_69, %c0_70] : memref<2x128x32xbf16, #tpu.memory_space<vmem>>, vector<1x128x32xbf16>
    %189 = vector.shape_cast %188 : vector<1x128x32xbf16> to vector<128x32xbf16>
    %cst_71 = arith.constant dense<0.000000e+00> : vector<16x32xf32>
    %190 = tpu.matmul %187, %189, %cst_71 {dimension_numbers = #tpu.dot_dimension_numbers<[1], [0], [0], [1], [0, 0, 1, 1], [], []>} : vector<16x128xbf16>, vector<128x32xbf16>, vector<16x32xf32> -> vector<16x32xf32>
    %c0_72 = arith.constant 0 : index
    %c5 = arith.constant 5 : index
    %c0_73 = arith.constant 0 : index
    %191 = vector.load %arg4[%c0_72, %c5, %c0_73] : memref<2x8x128xf32, #tpu.memory_space<vmem>>, vector<1x1x32xf32>
    %192 = vector.shape_cast %191 : vector<1x1x32xf32> to vector<1x32xf32>
    %193 = vector.broadcast %192 : vector<1x32xf32> to vector<16x32xf32>
    %194 = arith.addf %190, %193 : vector<16x32xf32>
    %195 = arith.addf %165, %194 : vector<16x32xf32>
    %c0_74 = arith.constant 0 : index
    %c6 = arith.constant 6 : index
    %c0_75 = arith.constant 0 : index
    %196 = vector.load %arg4[%c0_74, %c6, %c0_75] : memref<2x8x128xf32, #tpu.memory_space<vmem>>, vector<1x1x32xf32>
    %197 = vector.shape_cast %196 : vector<1x1x32xf32> to vector<1x32xf32>
    %c0_76 = arith.constant 0 : index
    %c7 = arith.constant 7 : index
    %c0_77 = arith.constant 0 : index
    %198 = vector.load %arg4[%c0_76, %c7, %c0_77] : memref<2x8x128xf32, #tpu.memory_space<vmem>>, vector<1x1x32xf32>
    %199 = vector.shape_cast %198 : vector<1x1x32xf32> to vector<1x32xf32>
    %cst_78 = arith.constant dense<0.000000e+00> : vector<16xf32>
    %200 = vector.multi_reduction <add>, %195, %cst_78 [1] : vector<16x32xf32> to vector<16xf32>
    %201 = vector.shape_cast %200 : vector<16xf32> to vector<16x1xf32>
    %cst_79 = arith.constant 3.200000e+01 : f32
    %202 = vector.broadcast %cst_79 : f32 to vector<16x1xf32>
    %203 = arith.divf %201, %202 : vector<16x1xf32>
    %204 = vector.broadcast %203 : vector<16x1xf32> to vector<16x32xf32>
    %205 = arith.subf %195, %204 : vector<16x32xf32>
    %206 = arith.mulf %205, %205 : vector<16x32xf32>
    %cst_80 = arith.constant dense<0.000000e+00> : vector<16xf32>
    %207 = vector.multi_reduction <add>, %206, %cst_80 [1] : vector<16x32xf32> to vector<16xf32>
    %208 = vector.shape_cast %207 : vector<16xf32> to vector<16x1xf32>
    %cst_81 = arith.constant 3.200000e+01 : f32
    %209 = vector.broadcast %cst_81 : f32 to vector<16x1xf32>
    %210 = arith.divf %208, %209 : vector<16x1xf32>
    %211 = vector.broadcast %203 : vector<16x1xf32> to vector<16x32xf32>
    %212 = arith.subf %195, %211 : vector<16x32xf32>
    %cst_82 = arith.constant 9.99999996E-13 : f32
    %213 = vector.broadcast %cst_82 : f32 to vector<16x1xf32>
    %214 = arith.addf %210, %213 : vector<16x1xf32>
    %215 = math.rsqrt %214 : vector<16x1xf32>
    %216 = vector.broadcast %215 : vector<16x1xf32> to vector<16x32xf32>
    %217 = arith.mulf %212, %216 : vector<16x32xf32>
    %218 = vector.broadcast %197 : vector<1x32xf32> to vector<16x32xf32>
    %219 = arith.mulf %217, %218 : vector<16x32xf32>
    %220 = vector.broadcast %199 : vector<1x32xf32> to vector<16x32xf32>
    %221 = arith.addf %219, %220 : vector<16x32xf32>
    %c1_83 = arith.constant 1 : index
    %c0_84 = arith.constant 0 : index
    %c0_85 = arith.constant 0 : index
    %222 = vector.load %arg2[%c1_83, %c0_84, %c0_85] : memref<2x64x128xbf16, #tpu.memory_space<vmem>>, vector<1x32x128xbf16>
    %223 = vector.shape_cast %222 : vector<1x32x128xbf16> to vector<32x128xbf16>
    %224 = arith.truncf %221 : vector<16x32xf32> to vector<16x32xbf16>
    %cst_86 = arith.constant dense<0.000000e+00> : vector<16x128xf32>
    %225 = tpu.matmul %224, %223, %cst_86 {dimension_numbers = #tpu.dot_dimension_numbers<[1], [0], [0], [1], [0, 0, 1, 1], [], []>} : vector<16x32xbf16>, vector<32x128xbf16>, vector<16x128xf32> -> vector<16x128xf32>
    %226 = vector.extract_strided_slice %225 {offsets = [0, 0], sizes = [16, 96], strides = [1, 1]} : vector<16x128xf32> to vector<16x96xf32>
    %c1_87 = arith.constant 1 : index
    %c0_88 = arith.constant 0 : index
    %c0_89 = arith.constant 0 : index
    %227 = vector.load %arg4[%c1_87, %c0_88, %c0_89] : memref<2x8x128xf32, #tpu.memory_space<vmem>>, vector<1x1x96xf32>
    %228 = vector.shape_cast %227 : vector<1x1x96xf32> to vector<1x96xf32>
    %229 = vector.broadcast %228 : vector<1x96xf32> to vector<16x96xf32>
    %230 = arith.addf %226, %229 : vector<16x96xf32>
    %231 = vector.extract_strided_slice %230 {offsets = [0, 0], sizes = [16, 8], strides = [1, 1]} : vector<16x96xf32> to vector<16x8xf32>
    %232 = arith.truncf %231 : vector<16x8xf32> to vector<16x8xbf16>
    %233 = vector.extract_strided_slice %230 {offsets = [0, 32], sizes = [16, 8], strides = [1, 1]} : vector<16x96xf32> to vector<16x8xf32>
    %234 = arith.truncf %233 : vector<16x8xf32> to vector<16x8xbf16>
    %235 = vector.extract_strided_slice %230 {offsets = [0, 64], sizes = [16, 8], strides = [1, 1]} : vector<16x96xf32> to vector<16x8xf32>
    %236 = arith.truncf %235 : vector<16x8xf32> to vector<16x8xbf16>
    %cst_90 = arith.constant dense<0.000000e+00> : vector<16x16xf32>
    %237 = tpu.matmul %232, %234, %cst_90 {dimension_numbers = #tpu.dot_dimension_numbers<[1], [1], [0], [0], [0, 0, 1, 0], [], []>} : vector<16x8xbf16>, vector<16x8xbf16>, vector<16x16xf32> -> vector<16x16xf32>
    %cst_91 = arith.constant 0.353553385 : f32
    %238 = vector.broadcast %cst_91 : f32 to vector<16x16xf32>
    %239 = arith.mulf %237, %238 : vector<16x16xf32>
    %240 = arith.addf %239, %0 : vector<16x16xf32>
    %cst_92 = arith.constant dense<0xFF800000> : vector<16xf32>
    %241 = vector.multi_reduction <maximumf>, %240, %cst_92 [1] : vector<16x16xf32> to vector<16xf32>
    %242 = vector.shape_cast %241 : vector<16xf32> to vector<16x1xf32>
    %243 = vector.broadcast %242 : vector<16x1xf32> to vector<16x16xf32>
    %244 = arith.subf %240, %243 : vector<16x16xf32>
    %245 = math.exp %244 : vector<16x16xf32>
    %cst_93 = arith.constant dense<0.000000e+00> : vector<16xf32>
    %246 = vector.multi_reduction <add>, %245, %cst_93 [1] : vector<16x16xf32> to vector<16xf32>
    %247 = vector.shape_cast %246 : vector<16xf32> to vector<16x1xf32>
    %248 = tpu.reciprocal %247 {approx = true} : vector<16x1xf32> -> vector<16x1xf32>
    %249 = vector.broadcast %248 : vector<16x1xf32> to vector<16x16xf32>
    %250 = arith.mulf %245, %249 : vector<16x16xf32>
    %251 = arith.truncf %250 : vector<16x16xf32> to vector<16x16xbf16>
    %cst_94 = arith.constant dense<0.000000e+00> : vector<16x8xf32>
    %252 = tpu.matmul %251, %236, %cst_94 {dimension_numbers = #tpu.dot_dimension_numbers<[1], [0], [0], [1], [0, 0, 1, 1], [], []>} : vector<16x16xbf16>, vector<16x8xbf16>, vector<16x8xf32> -> vector<16x8xf32>
    %253 = arith.truncf %252 : vector<16x8xf32> to vector<16x8xbf16>
    %c0_95 = arith.constant 0 : index
    %c0_96 = arith.constant 0 : index
    %254 = vector.load %arg11[%c0_95, %c0_96] : memref<16x32xbf16, #tpu.memory_space<vmem>>, vector<16x8xbf16>
    tpu.vector_store %arg11[%c0_95, %c0_96], %253 {strides = array<i32>} : memref<16x32xbf16, #tpu.memory_space<vmem>>, vector<16x8xbf16>,
    %255 = vector.extract_strided_slice %230 {offsets = [0, 8], sizes = [16, 8], strides = [1, 1]} : vector<16x96xf32> to vector<16x8xf32>
    %256 = arith.truncf %255 : vector<16x8xf32> to vector<16x8xbf16>
    %257 = vector.extract_strided_slice %230 {offsets = [0, 40], sizes = [16, 8], strides = [1, 1]} : vector<16x96xf32> to vector<16x8xf32>
    %258 = arith.truncf %257 : vector<16x8xf32> to vector<16x8xbf16>
    %259 = vector.extract_strided_slice %230 {offsets = [0, 72], sizes = [16, 8], strides = [1, 1]} : vector<16x96xf32> to vector<16x8xf32>
    %260 = arith.truncf %259 : vector<16x8xf32> to vector<16x8xbf16>
    %cst_97 = arith.constant dense<0.000000e+00> : vector<16x16xf32>
    %261 = tpu.matmul %256, %258, %cst_97 {dimension_numbers = #tpu.dot_dimension_numbers<[1], [1], [0], [0], [0, 0, 1, 0], [], []>} : vector<16x8xbf16>, vector<16x8xbf16>, vector<16x16xf32> -> vector<16x16xf32>
    %cst_98 = arith.constant 0.353553385 : f32
    %262 = vector.broadcast %cst_98 : f32 to vector<16x16xf32>
    %263 = arith.mulf %261, %262 : vector<16x16xf32>
    %264 = arith.addf %263, %0 : vector<16x16xf32>
    %cst_99 = arith.constant dense<0xFF800000> : vector<16xf32>
    %265 = vector.multi_reduction <maximumf>, %264, %cst_99 [1] : vector<16x16xf32> to vector<16xf32>
    %266 = vector.shape_cast %265 : vector<16xf32> to vector<16x1xf32>
    %267 = vector.broadcast %266 : vector<16x1xf32> to vector<16x16xf32>
    %268 = arith.subf %264, %267 : vector<16x16xf32>
    %269 = math.exp %268 : vector<16x16xf32>
    %cst_100 = arith.constant dense<0.000000e+00> : vector<16xf32>
    %270 = vector.multi_reduction <add>, %269, %cst_100 [1] : vector<16x16xf32> to vector<16xf32>
    %271 = vector.shape_cast %270 : vector<16xf32> to vector<16x1xf32>
    %272 = tpu.reciprocal %271 {approx = true} : vector<16x1xf32> -> vector<16x1xf32>
    %273 = vector.broadcast %272 : vector<16x1xf32> to vector<16x16xf32>
    %274 = arith.mulf %269, %273 : vector<16x16xf32>
    %275 = arith.truncf %274 : vector<16x16xf32> to vector<16x16xbf16>
    %cst_101 = arith.constant dense<0.000000e+00> : vector<16x8xf32>
    %276 = tpu.matmul %275, %260, %cst_101 {dimension_numbers = #tpu.dot_dimension_numbers<[1], [0], [0], [1], [0, 0, 1, 1], [], []>} : vector<16x16xbf16>, vector<16x8xbf16>, vector<16x8xf32> -> vector<16x8xf32>
    %277 = arith.truncf %276 : vector<16x8xf32> to vector<16x8xbf16>
    %c0_102 = arith.constant 0 : index
    %c8_103 = arith.constant 8 : index
    %278 = vector.load %arg11[%c0_102, %c8_103] : memref<16x32xbf16, #tpu.memory_space<vmem>>, vector<16x8xbf16>
    tpu.vector_store %arg11[%c0_102, %c8_103], %277 {strides = array<i32>} : memref<16x32xbf16, #tpu.memory_space<vmem>>, vector<16x8xbf16>,
    %279 = vector.extract_strided_slice %230 {offsets = [0, 16], sizes = [16, 8], strides = [1, 1]} : vector<16x96xf32> to vector<16x8xf32>
    %280 = arith.truncf %279 : vector<16x8xf32> to vector<16x8xbf16>
    %281 = vector.extract_strided_slice %230 {offsets = [0, 48], sizes = [16, 8], strides = [1, 1]} : vector<16x96xf32> to vector<16x8xf32>
    %282 = arith.truncf %281 : vector<16x8xf32> to vector<16x8xbf16>
    %283 = vector.extract_strided_slice %230 {offsets = [0, 80], sizes = [16, 8], strides = [1, 1]} : vector<16x96xf32> to vector<16x8xf32>
    %284 = arith.truncf %283 : vector<16x8xf32> to vector<16x8xbf16>
    %cst_104 = arith.constant dense<0.000000e+00> : vector<16x16xf32>
    %285 = tpu.matmul %280, %282, %cst_104 {dimension_numbers = #tpu.dot_dimension_numbers<[1], [1], [0], [0], [0, 0, 1, 0], [], []>} : vector<16x8xbf16>, vector<16x8xbf16>, vector<16x16xf32> -> vector<16x16xf32>
    %cst_105 = arith.constant 0.353553385 : f32
    %286 = vector.broadcast %cst_105 : f32 to vector<16x16xf32>
    %287 = arith.mulf %285, %286 : vector<16x16xf32>
    %288 = arith.addf %287, %0 : vector<16x16xf32>
    %cst_106 = arith.constant dense<0xFF800000> : vector<16xf32>
    %289 = vector.multi_reduction <maximumf>, %288, %cst_106 [1] : vector<16x16xf32> to vector<16xf32>
    %290 = vector.shape_cast %289 : vector<16xf32> to vector<16x1xf32>
    %291 = vector.broadcast %290 : vector<16x1xf32> to vector<16x16xf32>
    %292 = arith.subf %288, %291 : vector<16x16xf32>
    %293 = math.exp %292 : vector<16x16xf32>
    %cst_107 = arith.constant dense<0.000000e+00> : vector<16xf32>
    %294 = vector.multi_reduction <add>, %293, %cst_107 [1] : vector<16x16xf32> to vector<16xf32>
    %295 = vector.shape_cast %294 : vector<16xf32> to vector<16x1xf32>
    %296 = tpu.reciprocal %295 {approx = true} : vector<16x1xf32> -> vector<16x1xf32>
    %297 = vector.broadcast %296 : vector<16x1xf32> to vector<16x16xf32>
    %298 = arith.mulf %293, %297 : vector<16x16xf32>
    %299 = arith.truncf %298 : vector<16x16xf32> to vector<16x16xbf16>
    %cst_108 = arith.constant dense<0.000000e+00> : vector<16x8xf32>
    %300 = tpu.matmul %299, %284, %cst_108 {dimension_numbers = #tpu.dot_dimension_numbers<[1], [0], [0], [1], [0, 0, 1, 1], [], []>} : vector<16x16xbf16>, vector<16x8xbf16>, vector<16x8xf32> -> vector<16x8xf32>
    %301 = arith.truncf %300 : vector<16x8xf32> to vector<16x8xbf16>
    %c0_109 = arith.constant 0 : index
    %c16_110 = arith.constant 16 : index
    %302 = vector.load %arg11[%c0_109, %c16_110] : memref<16x32xbf16, #tpu.memory_space<vmem>>, vector<16x8xbf16>
    tpu.vector_store %arg11[%c0_109, %c16_110], %301 {strides = array<i32>} : memref<16x32xbf16, #tpu.memory_space<vmem>>, vector<16x8xbf16>,
    %303 = vector.extract_strided_slice %230 {offsets = [0, 24], sizes = [16, 8], strides = [1, 1]} : vector<16x96xf32> to vector<16x8xf32>
    %304 = arith.truncf %303 : vector<16x8xf32> to vector<16x8xbf16>
    %305 = vector.extract_strided_slice %230 {offsets = [0, 56], sizes = [16, 8], strides = [1, 1]} : vector<16x96xf32> to vector<16x8xf32>
    %306 = arith.truncf %305 : vector<16x8xf32> to vector<16x8xbf16>
    %307 = vector.extract_strided_slice %230 {offsets = [0, 88], sizes = [16, 8], strides = [1, 1]} : vector<16x96xf32> to vector<16x8xf32>
    %308 = arith.truncf %307 : vector<16x8xf32> to vector<16x8xbf16>
    %cst_111 = arith.constant dense<0.000000e+00> : vector<16x16xf32>
    %309 = tpu.matmul %304, %306, %cst_111 {dimension_numbers = #tpu.dot_dimension_numbers<[1], [1], [0], [0], [0, 0, 1, 0], [], []>} : vector<16x8xbf16>, vector<16x8xbf16>, vector<16x16xf32> -> vector<16x16xf32>
    %cst_112 = arith.constant 0.353553385 : f32
    %310 = vector.broadcast %cst_112 : f32 to vector<16x16xf32>
    %311 = arith.mulf %309, %310 : vector<16x16xf32>
    %312 = arith.addf %311, %0 : vector<16x16xf32>
    %cst_113 = arith.constant dense<0xFF800000> : vector<16xf32>
    %313 = vector.multi_reduction <maximumf>, %312, %cst_113 [1] : vector<16x16xf32> to vector<16xf32>
    %314 = vector.shape_cast %313 : vector<16xf32> to vector<16x1xf32>
    %315 = vector.broadcast %314 : vector<16x1xf32> to vector<16x16xf32>
    %316 = arith.subf %312, %315 : vector<16x16xf32>
    %317 = math.exp %316 : vector<16x16xf32>
    %cst_114 = arith.constant dense<0.000000e+00> : vector<16xf32>
    %318 = vector.multi_reduction <add>, %317, %cst_114 [1] : vector<16x16xf32> to vector<16xf32>
    %319 = vector.shape_cast %318 : vector<16xf32> to vector<16x1xf32>
    %320 = tpu.reciprocal %319 {approx = true} : vector<16x1xf32> -> vector<16x1xf32>
    %321 = vector.broadcast %320 : vector<16x1xf32> to vector<16x16xf32>
    %322 = arith.mulf %317, %321 : vector<16x16xf32>
    %323 = arith.truncf %322 : vector<16x16xf32> to vector<16x16xbf16>
    %cst_115 = arith.constant dense<0.000000e+00> : vector<16x8xf32>
    %324 = tpu.matmul %323, %308, %cst_115 {dimension_numbers = #tpu.dot_dimension_numbers<[1], [0], [0], [1], [0, 0, 1, 1], [], []>} : vector<16x16xbf16>, vector<16x8xbf16>, vector<16x8xf32> -> vector<16x8xf32>
    %325 = arith.truncf %324 : vector<16x8xf32> to vector<16x8xbf16>
    %c0_116 = arith.constant 0 : index
    %c24_117 = arith.constant 24 : index
    %326 = vector.load %arg11[%c0_116, %c24_117] : memref<16x32xbf16, #tpu.memory_space<vmem>>, vector<16x8xbf16>
    tpu.vector_store %arg11[%c0_116, %c24_117], %325 {strides = array<i32>} : memref<16x32xbf16, #tpu.memory_space<vmem>>, vector<16x8xbf16>,
    %c1_118 = arith.constant 1 : index
    %c0_119 = arith.constant 0 : index
    %c96_120 = arith.constant 96 : index
    %327 = vector.load %arg2[%c1_118, %c0_119, %c96_120] : memref<2x64x128xbf16, #tpu.memory_space<vmem>>, vector<1x32x32xbf16>
    %328 = vector.shape_cast %327 : vector<1x32x32xbf16> to vector<32x32xbf16>
    %c0_121 = arith.constant 0 : index
    %c0_122 = arith.constant 0 : index
    %329 = vector.load %arg11[%c0_121, %c0_122] : memref<16x32xbf16, #tpu.memory_space<vmem>>, vector<16x32xbf16>
    %cst_123 = arith.constant dense<0.000000e+00> : vector<16x32xf32>
    %330 = tpu.matmul %329, %328, %cst_123 {dimension_numbers = #tpu.dot_dimension_numbers<[1], [0], [0], [1], [0, 0, 1, 1], [], []>} : vector<16x32xbf16>, vector<32x32xbf16>, vector<16x32xf32> -> vector<16x32xf32>
    %c1_124 = arith.constant 1 : index
    %c1_125 = arith.constant 1 : index
    %c0_126 = arith.constant 0 : index
    %331 = vector.load %arg4[%c1_124, %c1_125, %c0_126] : memref<2x8x128xf32, #tpu.memory_space<vmem>>, vector<1x1x32xf32>
    %332 = vector.shape_cast %331 : vector<1x1x32xf32> to vector<1x32xf32>
    %333 = vector.broadcast %332 : vector<1x32xf32> to vector<16x32xf32>
    %334 = arith.addf %330, %333 : vector<16x32xf32>
    %335 = arith.addf %221, %334 : vector<16x32xf32>
    %c1_127 = arith.constant 1 : index
    %c2_128 = arith.constant 2 : index
    %c0_129 = arith.constant 0 : index
    %336 = vector.load %arg4[%c1_127, %c2_128, %c0_129] : memref<2x8x128xf32, #tpu.memory_space<vmem>>, vector<1x1x32xf32>
    %337 = vector.shape_cast %336 : vector<1x1x32xf32> to vector<1x32xf32>
    %c1_130 = arith.constant 1 : index
    %c3_131 = arith.constant 3 : index
    %c0_132 = arith.constant 0 : index
    %338 = vector.load %arg4[%c1_130, %c3_131, %c0_132] : memref<2x8x128xf32, #tpu.memory_space<vmem>>, vector<1x1x32xf32>
    %339 = vector.shape_cast %338 : vector<1x1x32xf32> to vector<1x32xf32>
    %cst_133 = arith.constant dense<0.000000e+00> : vector<16xf32>
    %340 = vector.multi_reduction <add>, %335, %cst_133 [1] : vector<16x32xf32> to vector<16xf32>
    %341 = vector.shape_cast %340 : vector<16xf32> to vector<16x1xf32>
    %cst_134 = arith.constant 3.200000e+01 : f32
    %342 = vector.broadcast %cst_134 : f32 to vector<16x1xf32>
    %343 = arith.divf %341, %342 : vector<16x1xf32>
    %344 = vector.broadcast %343 : vector<16x1xf32> to vector<16x32xf32>
    %345 = arith.subf %335, %344 : vector<16x32xf32>
    %346 = arith.mulf %345, %345 : vector<16x32xf32>
    %cst_135 = arith.constant dense<0.000000e+00> : vector<16xf32>
    %347 = vector.multi_reduction <add>, %346, %cst_135 [1] : vector<16x32xf32> to vector<16xf32>
    %348 = vector.shape_cast %347 : vector<16xf32> to vector<16x1xf32>
    %cst_136 = arith.constant 3.200000e+01 : f32
    %349 = vector.broadcast %cst_136 : f32 to vector<16x1xf32>
    %350 = arith.divf %348, %349 : vector<16x1xf32>
    %351 = vector.broadcast %343 : vector<16x1xf32> to vector<16x32xf32>
    %352 = arith.subf %335, %351 : vector<16x32xf32>
    %cst_137 = arith.constant 9.99999996E-13 : f32
    %353 = vector.broadcast %cst_137 : f32 to vector<16x1xf32>
    %354 = arith.addf %350, %353 : vector<16x1xf32>
    %355 = math.rsqrt %354 : vector<16x1xf32>
    %356 = vector.broadcast %355 : vector<16x1xf32> to vector<16x32xf32>
    %357 = arith.mulf %352, %356 : vector<16x32xf32>
    %358 = vector.broadcast %337 : vector<1x32xf32> to vector<16x32xf32>
    %359 = arith.mulf %357, %358 : vector<16x32xf32>
    %360 = vector.broadcast %339 : vector<1x32xf32> to vector<16x32xf32>
    %361 = arith.addf %359, %360 : vector<16x32xf32>
    %c1_138 = arith.constant 1 : index
    %c32_139 = arith.constant 32 : index
    %c0_140 = arith.constant 0 : index
    %362 = vector.load %arg2[%c1_138, %c32_139, %c0_140] : memref<2x64x128xbf16, #tpu.memory_space<vmem>>, vector<1x32x128xbf16>
    %363 = vector.shape_cast %362 : vector<1x32x128xbf16> to vector<32x128xbf16>
    %364 = arith.truncf %361 : vector<16x32xf32> to vector<16x32xbf16>
    %cst_141 = arith.constant dense<0.000000e+00> : vector<16x128xf32>
    %365 = tpu.matmul %364, %363, %cst_141 {dimension_numbers = #tpu.dot_dimension_numbers<[1], [0], [0], [1], [0, 0, 1, 1], [], []>} : vector<16x32xbf16>, vector<32x128xbf16>, vector<16x128xf32> -> vector<16x128xf32>
    %c1_142 = arith.constant 1 : index
    %c4_143 = arith.constant 4 : index
    %c0_144 = arith.constant 0 : index
    %366 = vector.load %arg4[%c1_142, %c4_143, %c0_144] : memref<2x8x128xf32, #tpu.memory_space<vmem>>, vector<1x1x128xf32>
    %367 = vector.shape_cast %366 : vector<1x1x128xf32> to vector<1x128xf32>
    %368 = vector.broadcast %367 : vector<1x128xf32> to vector<16x128xf32>
    %369 = arith.addf %365, %368 : vector<16x128xf32>
    %cst_145 = arith.constant 5.000000e-01 : f32
    %370 = vector.broadcast %cst_145 : f32 to vector<16x128xf32>
    %371 = arith.mulf %370, %369 : vector<16x128xf32>
    %cst_146 = arith.constant 4.471500e-02 : f32
    %372 = vector.broadcast %cst_146 : f32 to vector<16x128xf32>
    %373 = arith.mulf %372, %369 : vector<16x128xf32>
    %374 = arith.mulf %373, %369 : vector<16x128xf32>
    %375 = arith.mulf %374, %369 : vector<16x128xf32>
    %376 = arith.addf %369, %375 : vector<16x128xf32>
    %cst_147 = arith.constant 0.797884583 : f32
    %377 = vector.broadcast %cst_147 : f32 to vector<16x128xf32>
    %378 = arith.mulf %377, %376 : vector<16x128xf32>
    %379 = math.tanh %378 : vector<16x128xf32>
    %cst_148 = arith.constant 1.000000e+00 : f32
    %380 = vector.broadcast %cst_148 : f32 to vector<16x128xf32>
    %381 = arith.addf %380, %379 : vector<16x128xf32>
    %382 = arith.mulf %371, %381 : vector<16x128xf32>
    %383 = arith.truncf %382 : vector<16x128xf32> to vector<16x128xbf16>
    %c1_149 = arith.constant 1 : index
    %c0_150 = arith.constant 0 : index
    %c0_151 = arith.constant 0 : index
    %384 = vector.load %arg3[%c1_149, %c0_150, %c0_151] : memref<2x128x32xbf16, #tpu.memory_space<vmem>>, vector<1x128x32xbf16>
    %385 = vector.shape_cast %384 : vector<1x128x32xbf16> to vector<128x32xbf16>
    %cst_152 = arith.constant dense<0.000000e+00> : vector<16x32xf32>
    %386 = tpu.matmul %383, %385, %cst_152 {dimension_numbers = #tpu.dot_dimension_numbers<[1], [0], [0], [1], [0, 0, 1, 1], [], []>} : vector<16x128xbf16>, vector<128x32xbf16>, vector<16x32xf32> -> vector<16x32xf32>
    %c1_153 = arith.constant 1 : index
    %c5_154 = arith.constant 5 : index
    %c0_155 = arith.constant 0 : index
    %387 = vector.load %arg4[%c1_153, %c5_154, %c0_155] : memref<2x8x128xf32, #tpu.memory_space<vmem>>, vector<1x1x32xf32>
    %388 = vector.shape_cast %387 : vector<1x1x32xf32> to vector<1x32xf32>
    %389 = vector.broadcast %388 : vector<1x32xf32> to vector<16x32xf32>
    %390 = arith.addf %386, %389 : vector<16x32xf32>
    %391 = arith.addf %361, %390 : vector<16x32xf32>
    %c1_156 = arith.constant 1 : index
    %c6_157 = arith.constant 6 : index
    %c0_158 = arith.constant 0 : index
    %392 = vector.load %arg4[%c1_156, %c6_157, %c0_158] : memref<2x8x128xf32, #tpu.memory_space<vmem>>, vector<1x1x32xf32>
    %393 = vector.shape_cast %392 : vector<1x1x32xf32> to vector<1x32xf32>
    %c1_159 = arith.constant 1 : index
    %c7_160 = arith.constant 7 : index
    %c0_161 = arith.constant 0 : index
    %394 = vector.load %arg4[%c1_159, %c7_160, %c0_161] : memref<2x8x128xf32, #tpu.memory_space<vmem>>, vector<1x1x32xf32>
    %395 = vector.shape_cast %394 : vector<1x1x32xf32> to vector<1x32xf32>
    %cst_162 = arith.constant dense<0.000000e+00> : vector<16xf32>
    %396 = vector.multi_reduction <add>, %391, %cst_162 [1] : vector<16x32xf32> to vector<16xf32>
    %397 = vector.shape_cast %396 : vector<16xf32> to vector<16x1xf32>
    %cst_163 = arith.constant 3.200000e+01 : f32
    %398 = vector.broadcast %cst_163 : f32 to vector<16x1xf32>
    %399 = arith.divf %397, %398 : vector<16x1xf32>
    %400 = vector.broadcast %399 : vector<16x1xf32> to vector<16x32xf32>
    %401 = arith.subf %391, %400 : vector<16x32xf32>
    %402 = arith.mulf %401, %401 : vector<16x32xf32>
    %cst_164 = arith.constant dense<0.000000e+00> : vector<16xf32>
    %403 = vector.multi_reduction <add>, %402, %cst_164 [1] : vector<16x32xf32> to vector<16xf32>
    %404 = vector.shape_cast %403 : vector<16xf32> to vector<16x1xf32>
    %cst_165 = arith.constant 3.200000e+01 : f32
    %405 = vector.broadcast %cst_165 : f32 to vector<16x1xf32>
    %406 = arith.divf %404, %405 : vector<16x1xf32>
    %407 = vector.broadcast %399 : vector<16x1xf32> to vector<16x32xf32>
    %408 = arith.subf %391, %407 : vector<16x32xf32>
    %cst_166 = arith.constant 9.99999996E-13 : f32
    %409 = vector.broadcast %cst_166 : f32 to vector<16x1xf32>
    %410 = arith.addf %406, %409 : vector<16x1xf32>
    %411 = math.rsqrt %410 : vector<16x1xf32>
    %412 = vector.broadcast %411 : vector<16x1xf32> to vector<16x32xf32>
    %413 = arith.mulf %408, %412 : vector<16x32xf32>
    %414 = vector.broadcast %393 : vector<1x32xf32> to vector<16x32xf32>
    %415 = arith.mulf %413, %414 : vector<16x32xf32>
    %416 = vector.broadcast %395 : vector<1x32xf32> to vector<16x32xf32>
    %417 = arith.addf %415, %416 : vector<16x32xf32>
    %c0_167 = arith.constant 0 : index
    %c0_168 = arith.constant 0 : index
    %418 = vector.load %arg8[%c0_167, %c0_168] : memref<16x32xf32, #tpu.memory_space<vmem>>, vector<16x32xf32>
    tpu.vector_store %arg8[%c0_167, %c0_168], %417 {strides = array<i32>} : memref<16x32xf32, #tpu.memory_space<vmem>>, vector<16x32xf32>,
    %419 = vector.extract_strided_slice %417 {offsets = [0, 0], sizes = [1, 32], strides = [1, 1]} : vector<16x32xf32> to vector<1x32xf32>
    %420 = vector.extract_strided_slice %417 {offsets = [8, 0], sizes = [1, 32], strides = [1, 1]} : vector<16x32xf32> to vector<1x32xf32>
    %421 = tpu.concatenate %419, %420 in 0 : vector<1x32xf32>, vector<1x32xf32> -> vector<2x32xf32>
    %422 = arith.truncf %421 : vector<2x32xf32> to vector<2x32xbf16>
    %c0_169 = arith.constant 0 : index
    %c0_170 = arith.constant 0 : index
    %423 = vector.load %arg5[%c0_169, %c0_170] : memref<32x32xbf16, #tpu.memory_space<vmem>>, vector<32x32xbf16>
    %cst_171 = arith.constant dense<0.000000e+00> : vector<2x32xf32>
    %424 = tpu.matmul %422, %423, %cst_171 {dimension_numbers = #tpu.dot_dimension_numbers<[1], [0], [0], [1], [0, 0, 1, 1], [], []>} : vector<2x32xbf16>, vector<32x32xbf16>, vector<2x32xf32> -> vector<2x32xf32>
    %c2_172 = arith.constant 2 : index
    %c0_173 = arith.constant 0 : index
    %425 = vector.load %arg7[%c2_172, %c0_173] : memref<4x128xf32, #tpu.memory_space<vmem>>, vector<1x32xf32>
    %426 = vector.broadcast %425 : vector<1x32xf32> to vector<2x32xf32>
    %427 = arith.addf %424, %426 : vector<2x32xf32>
    %428 = math.tanh %427 : vector<2x32xf32>
    %c0_174 = arith.constant 0 : index
    %c0_175 = arith.constant 0 : index
    %429 = vector.load %arg9[%c0_174, %c0_175] : memref<2x32xf32, #tpu.memory_space<vmem>>, vector<2x32xf32>
    tpu.vector_store %arg9[%c0_174, %c0_175], %428 {strides = array<i32>} : memref<2x32xf32, #tpu.memory_space<vmem>>, vector<2x32xf32>,
    %430 = arith.truncf %428 : vector<2x32xf32> to vector<2x32xbf16>
    %c0_176 = arith.constant 0 : index
    %c0_177 = arith.constant 0 : index
    %431 = vector.load %arg6[%c0_176, %c0_177] : memref<32x128xbf16, #tpu.memory_space<vmem>>, vector<32x128xbf16>
    %cst_178 = arith.constant dense<0.000000e+00> : vector<2x128xf32>
    %432 = tpu.matmul %430, %431, %cst_178 {dimension_numbers = #tpu.dot_dimension_numbers<[1], [0], [0], [1], [0, 0, 1, 1], [], []>} : vector<2x32xbf16>, vector<32x128xbf16>, vector<2x128xf32> -> vector<2x128xf32>
    %433 = vector.extract_strided_slice %432 {offsets = [0, 0], sizes = [2, 3], strides = [1, 1]} : vector<2x128xf32> to vector<2x3xf32>
    %c3_179 = arith.constant 3 : index
    %c0_180 = arith.constant 0 : index
    %434 = vector.load %arg7[%c3_179, %c0_180] : memref<4x128xf32, #tpu.memory_space<vmem>>, vector<1x3xf32>
    %435 = vector.broadcast %434 : vector<1x3xf32> to vector<2x3xf32>
    %436 = arith.addf %433, %435 : vector<2x3xf32>
    %c0_181 = arith.constant 0 : index
    %c0_182 = arith.constant 0 : index
    %437 = vector.load %arg10[%c0_181, %c0_182] : memref<2x3xf32, #tpu.memory_space<vmem>>, vector<2x3xf32>
    tpu.vector_store %arg10[%c0_181, %c0_182], %436 {strides = array<i32>} : memref<2x3xf32, #tpu.memory_space<vmem>>, vector<2x3xf32>,
    return
  }
}

</mosaic_0001>

<llo_original>
// kernel: san_bert_forward.1
$region0: #{san_bert_forward.1}
  #allocation0 [shape = 'u32[]', space=smem, size = 0x4, offset = 0x4, fixed_abs, tag = 'smem constant byte address 0x4 - core index']
  #allocation1 [shape = 'u32[144,128]{1,0:T(1,128)}', space=vmem, size = 0x12000, scoped, tag = 'internal scratch']
  #allocation2 [shape = 'bf16[16,32]{1,0:T(16,128)(2,1)}', space=vmem, size = 0x1000, scoped, tag = 'scratch operand']
  %s0 = inlined_call_operand.vmem [shape: f32[16,32], index: 0, kind: input, shape index: {}]
  %s1 = inlined_call_operand.vmem [shape: f32[16,16], index: 1, kind: input, shape index: {}]
  %s2 = inlined_call_operand.vmem [shape: bf16[2,64,128], index: 2, kind: input, shape index: {}]
  %s3 = inlined_call_operand.vmem [shape: bf16[2,128,32], index: 3, kind: input, shape index: {}]
  %s4 = inlined_call_operand.vmem [shape: f32[2,8,128], index: 4, kind: input, shape index: {}]
  %s5 = inlined_call_operand.vmem [shape: bf16[32,32], index: 5, kind: input, shape index: {}]
  %s6 = inlined_call_operand.vmem [shape: bf16[32,128], index: 6, kind: input, shape index: {}]
  %s7 = inlined_call_operand.vmem [shape: f32[4,128], index: 7, kind: input, shape index: {}]
  %s8 = inlined_call_operand.hbm [shape: f32[16,32], index: 8, kind: output, shape index: {0}]
  %s9 = inlined_call_operand.hbm [shape: f32[2,32], index: 9, kind: output, shape index: {1}]
  %s10 = inlined_call_operand.hbm [shape: f32[2,3], index: 10, kind: output, shape index: {2}]
  %11 = xla_tuple %s8, %s9, %s10
  %s12 = sld [smem:[#allocation0]]
  $region58: #{san_bert_forward.1} parent=0
    _
  %s14 = ssub.s32 1, %s12
  %s15 = scalar_select 0, %s14, %s12
  $region1: #{san_bert_forward.1} parent=0
    #allocation3 [shape = 'u8[8192]{0}', space=vmem, size = 0x2000, scoped, tag = 'output window, operand 0, single buffered']
    #allocation4 [shape = 's32[1]{0}', space=sflag, size = 0x4, scoped, tag = 'scoped memory for san_bert_forward.1']
    #allocation5 [shape = 'u8[1024]{0}', space=vmem, size = 0x400, scoped, tag = 'output window, operand 1, single buffered']
    #allocation6 [shape = 's32[1]{0}', space=sflag, size = 0x4, scoped, tag = 'scoped memory for san_bert_forward.1']
    #allocation7 [shape = 'u8[1024]{0}', space=vmem, size = 0x400, scoped, tag = 'output window, operand 2, single buffered']
    %16 = vsyncpa [#allocation4], 0
    %17 = vsyncpa [#allocation6], 0
    // Predicated region
    $region2: #{san_bert_forward.1} parent=1 // pred_check
      _
    $region3: #{san_bert_forward.1} parent=1 // pred_check_branch
      %19 = sbr.rel (0) target = $region5
    $region4: #{san_bert_forward.1} parent=1 // pred_region
      _
    $region5: #{san_bert_forward.1} parent=1 // pred_fallthru
      _
    // Predicated region
    $region6: #{san_bert_forward.1} parent=1 // pred_check
      _
    $region7: #{san_bert_forward.1} parent=1 // pred_check_branch
      %21 = sbr.rel (0) target = $region9
    $region8: #{san_bert_forward.1} parent=1 // pred_region
      _
    $region9: #{san_bert_forward.1} parent=1 // pred_fallthru
      _
    // Predicated region
    $region10: #{san_bert_forward.1} parent=1 // pred_check
      _
    $region11: #{san_bert_forward.1} parent=1 // pred_check_branch
      %23 = sbr.rel (0) target = $region13
    $region12: #{san_bert_forward.1} parent=1 // pred_region
      _
    $region13: #{san_bert_forward.1} parent=1 // pred_fallthru
      _
    // Predicated region
    $region14: #{san_bert_forward.1} parent=1 // pred_check
      _
    $region15: #{san_bert_forward.1} parent=1 // pred_check_branch
      %25 = sbr.rel (0) target = $region17
    $region16: #{san_bert_forward.1} parent=1 // pred_region
      _
    $region17: #{san_bert_forward.1} parent=1 // pred_fallthru
      _
    // Predicated region
    $region18: #{san_bert_forward.1} parent=1 // pred_check
      _
    $region19: #{san_bert_forward.1} parent=1 // pred_check_branch
      %27 = sbr.rel (0) target = $region21
    $region20: #{san_bert_forward.1} parent=1 // pred_region
      _
    $region21: #{san_bert_forward.1} parent=1 // pred_fallthru
      _
    // Predicated region
    $region22: #{san_bert_forward.1} parent=1 // pred_check
      _
    $region23: #{san_bert_forward.1} parent=1 // pred_check_branch
      %29 = sbr.rel (0) target = $region25
    $region24: #{san_bert_forward.1} parent=1 // pred_region
      _
    $region25: #{san_bert_forward.1} parent=1 // pred_fallthru
      _
    // Predicated region
    $region26: #{san_bert_forward.1} parent=1 // pred_check
      _
    $region27: #{san_bert_forward.1} parent=1 // pred_check_branch
      %31 = sbr.rel (0) target = $region29
    $region28: #{san_bert_forward.1} parent=1 // pred_region
      _
    $region29: #{san_bert_forward.1} parent=1 // pred_fallthru
      _
    // Predicated region
    $region30: #{san_bert_forward.1} parent=1 // pred_check
      _
    $region31: #{san_bert_forward.1} parent=1 // pred_check_branch
      %33 = sbr.rel (0) target = $region33
    $region32: #{san_bert_forward.1} parent=1 // pred_region
      _
    $region33: #{san_bert_forward.1} parent=1 // pred_fallthru
      _
    %v35 = vld [vmem:[%s1] sm:$0xff]
    %v36 = vld [vmem:[%s1 + $0x8] sm:$0xff]
    %v37 = vld [vmem:[%s0] sm:$0xff]
    %v38 = vld [vmem:[%s0 + $0x8] sm:$0xff]
    %v39 = vld [vmem:[%s7] sm:$0x1]
    %v40 = vld [vmem:[%s7 + $0x1] sm:$0x1]
    %vm41 = vcmask 261120
    %v42 = vsel %vm41, %v37, 0.0
    %43 = vadd.xlane.f32.xlu0 %v42
    %v44 = vpop.xlane.xlu0 %43
    %v45 = vsel %vm41, %v38, 0.0
    %46 = vadd.xlane.f32.xlu0 %v45
    %v47 = vpop.xlane.xlu0 %46
    %v48 = vrcp.pop 32.0
    %v49 = vmul.f32 %v44, %v48
    %v50 = vmul.f32 %v47, %v48
    %v51 = vsub.f32 %v37, %v49
    %v52 = vsub.f32 %v38, %v50
    %v53 = vmul.f32 %v51, %v51
    %v54 = vmul.f32 %v52, %v52
    %v55 = vsel %vm41, %v53, 0.0
    %56 = vadd.xlane.f32.xlu0 %v55
    %v57 = vpop.xlane.xlu0 %56
    %v58 = vsel %vm41, %v54, 0.0
    %59 = vadd.xlane.f32.xlu0 %v58
    %v60 = vpop.xlane.xlu0 %59
    %v61 = vmul.f32 %v57, %v48
    %v62 = vmul.f32 %v60, %v48
    %v63 = vadd.f32 %v61, 1e-12
    %v64 = vadd.f32 %v62, 1e-12
    %v65 = vrsqrt.pop %v63
    %v66 = vrsqrt.pop %v64
    %v67 = vmul.f32 %v51, %v65
    %v68 = vmul.f32 %v52, %v66
    %v69 = vlaneseq
    %v70 = vshrl.u32 %v69, 7
    %v71 = vsub.s32 0, %v70
    %v72 = vrot.slane %v39, %v71
    %v73 = vmul.f32 %v67, %v72
    %v74 = vmul.f32 %v68, %v72
    %v75 = vlaneseq
    %v76 = vshrl.u32 %v75, 7
    %v77 = vsub.s32 0, %v76
    %v78 = vrot.slane %v40, %v77
    %v79 = vadd.f32 %v73, %v78
    %v80 = vadd.f32 %v74, %v78
    %v81 = vld [vmem:[%s2] sm:$0xf]
    %v82 = vld [vmem:[%s2 + $0x4] sm:$0xf]
    %v83 = vld [vmem:[%s2 + $0x8] sm:$0xf]
    %v84 = vld [vmem:[%s2 + $0xc] sm:$0xf]
    %v85 = vpack.c.bf16 %v80, %v79
    %v90 = vunpack.c.l.b16 %v81
    %v91 = vunpack.c.l.b16 %v82
    %v92 = vunpack.c.l.b16 %v83
    %v93 = vunpack.c.l.b16 %v84
    %v94 = vpack.c.b16 %v91, %v90
    %v95 = vpack.c.b16 %v93, %v92
    %v99 = vsel %vm41, %v85, 0
    %101 = vmatprep.subr.bf16.mxu0 0
    %102 = vmatpush1.bf16.msra.mxu0 %v94
    %103 = vmatprep.subr.bf16.mxu0 0
    %104 = vmatpush1.bf16.msra.mxu0 %v95
    %105 = vmatprep.subr.bf16.mxu0 0
    %106 = vmatpush1.bf16.msra.mxu0 0
    %107 = vmatprep.subr.bf16.mxu0 0
    %108 = vmatpush1.bf16.msra.mxu0 0
    %109 = vmatprep.subr.bf16.mxu0 0
    %110 = vmatpush1.bf16.msra.mxu0 0
    %111 = vmatprep.subr.bf16.mxu0 0
    %112 = vmatpush1.bf16.msra.mxu0 0
    %113 = vmatprep.subr.bf16.mxu0 0
    %114 = vmatpush1.bf16.msra.mxu0 0
    %115 = vmatprep.subr.bf16.mxu0 0
    %116 = vmatpush1.bf16.msra.mxu0 0
    %117 = vmatprep.subr.bf16.mxu0 0
    %118 = vmatpush1.bf16.msra.mxu0 0
    %119 = vmatprep.subr.bf16.mxu0 0
    %120 = vmatpush1.bf16.msra.mxu0 0
    %121 = vmatprep.subr.bf16.mxu0 0
    %122 = vmatpush1.bf16.msra.mxu0 0
    %123 = vmatprep.subr.bf16.mxu0 0
    %124 = vmatpush1.bf16.msra.mxu0 0
    %125 = vmatprep.subr.bf16.mxu0 0
    %126 = vmatpush1.bf16.msra.mxu0 0
    %127 = vmatprep.subr.bf16.mxu0 0
    %128 = vmatpush1.bf16.msra.mxu0 0
    %129 = vmatprep.subr.bf16.mxu0 0
    %130 = vmatpush1.bf16.msra.mxu0 0
    %131 = vmatprep.subr.bf16.mxu0 0
    %132 = vmatpush1.bf16.msra.mxu0 0
    %133 = vmatprep.mubr.bf16.mxu0 0
    %134 = vmatmul.mubr.bf16.gmra.mrb[0].mxu0 %v99
    %v135 = vpop.f32.mrb[0].mxu0
    %v136 = vadd.f32 0.0, %v135
    %v137 = vpop.f32.mrb[0].mxu0
    %v138 = vpop.f32.mrb[0].mxu0
    %v139 = vadd.f32 0.0, %v138
    %v140 = vpop.f32.mrb[0].mxu0
    %141 = vdwg.mxu0
    %v142 = vld [vmem:[%s4] sm:$0x1]
    %v143 = vlaneseq
    %v144 = vshrl.u32 %v143, 7
    %v145 = vsub.s32 0, %v144
    %v146 = vrot.slane %v142, %v145
    %v147 = vadd.f32 %v136, %v146
    %v148 = vadd.f32 %v139, %v146
    %v149 = vpack.c.bf16 %v148, %v147
    %151 = vrot.lane.b32.xlu0 %v149, 96
    %v152 = vpop.permute.xlu0 %151
    %vm153 = vcmask 64512
    %v155 = vsel %vm153, %v149, 0
    %v158 = vsel %vm153, %v152, 0
    %160 = vmatprep.subr.bf16.mxu0 0
    %161 = vmatpush1.bf16.xpose.msra.mxu0 %v158
    %162 = vmatprep.subr.bf16.mxu0 0
    %163 = vmatpush1.bf16.xpose.msra.mxu0 0
    %164 = vmatprep.subr.bf16.mxu0 0
    %165 = vmatpush1.bf16.xpose.msra.mxu0 0
    %166 = vmatprep.subr.bf16.mxu0 0
    %167 = vmatpush1.bf16.xpose.msra.mxu0 0
    %168 = vmatprep.subr.bf16.mxu0 0
    %169 = vmatpush1.bf16.xpose.msra.mxu0 0
    %170 = vmatprep.subr.bf16.mxu0 0
    %171 = vmatpush1.bf16.xpose.msra.mxu0 0
    %172 = vmatprep.subr.bf16.mxu0 0
    %173 = vmatpush1.bf16.xpose.msra.mxu0 0
    %174 = vmatprep.subr.bf16.mxu0 0
    %175 = vmatpush1.bf16.xpose.msra.mxu0 0
    %176 = vmatprep.subr.bf16.mxu0 0
    %177 = vmatpush1.bf16.xpose.msra.mxu0 0
    %178 = vmatprep.subr.bf16.mxu0 0
    %179 = vmatpush1.bf16.xpose.msra.mxu0 0
    %180 = vmatprep.subr.bf16.mxu0 0
    %181 = vmatpush1.bf16.xpose.msra.mxu0 0
    %182 = vmatprep.subr.bf16.mxu0 0
    %183 = vmatpush1.bf16.xpose.msra.mxu0 0
    %184 = vmatprep.subr.bf16.mxu0 0
    %185 = vmatpush1.bf16.xpose.msra.mxu0 0
    %186 = vmatprep.subr.bf16.mxu0 0
    %187 = vmatpush1.bf16.xpose.msra.mxu0 0
    %188 = vmatprep.subr.bf16.mxu0 0
    %189 = vmatpush1.bf16.xpose.msra.mxu0 0
    %190 = vmatprep.subr.bf16.mxu0 0
    %191 = vmatpush1.bf16.xpose.msra.mxu0 0
    %192 = vmatprep.mubr.bf16.mxu0 0
    %193 = vmatmul.mubr.bf16.gmra.mrb[0].mxu0 %v155
    %v194 = vpop.f32.mrb[0].mxu0
    %v195 = vadd.f32 0.0, %v194
    %v196 = vpop.f32.mrb[0].mxu0
    %v197 = vpop.f32.mrb[0].mxu0
    %v198 = vadd.f32 0.0, %v197
    %v199 = vpop.f32.mrb[0].mxu0
    %200 = vdwg.mxu0
    %v201 = vmul.f32 %v195, 0.35355338
    %v202 = vmul.f32 %v198, 0.35355338
    %v203 = vadd.f32 %v201, %v35
    %v204 = vadd.f32 %v202, %v36
    %vm205 = vcmask 130048
    %v206 = vsel %vm205, %v203, -inf
    %207 = vmax.xlane.f32.xlu0 %v206
    %v208 = vpop.xlane.xlu0 %207
    %v209 = vsel %vm205, %v204, -inf
    %210 = vmax.xlane.f32.xlu0 %v209
    %v211 = vpop.xlane.xlu0 %210
    %v212 = vsub.f32 %v203, %v208
    %v213 = vsub.f32 %v204, %v211
    %v214 = vmul.f32 %v212, 1.442695
    %v215 = vpow.pop %v214
    %v216 = vmul.f32 %v213, 1.442695
    %v217 = vpow.pop %v216
    %v218 = vsel %vm205, %v215, 0.0
    %219 = vadd.xlane.f32.xlu0 %v218
    %v220 = vpop.xlane.xlu0 %219
    %v221 = vsel %vm205, %v217, 0.0
    %222 = vadd.xlane.f32.xlu0 %v221
    %v223 = vpop.xlane.xlu0 %222
    %v224 = vrcp.pop %v220
    %v225 = vrcp.pop %v223
    %v226 = vmul.f32 %v215, %v224
    %v227 = vmul.f32 %v217, %v225
    %v228 = vpack.c.bf16 %v227, %v226
    %229 = vrot.lane.b32.xlu0 %v149, 64
    %v230 = vpop.permute.xlu0 %229
    %v233 = vsel %vm205, %v228, 0
    %235 = vmatprep.subr.bf16.mxu0 0
    %236 = vmatpush1.bf16.msra.mxu0 %v230
    %237 = vmatprep.subr.bf16.mxu0 0
    %238 = vmatpush1.bf16.msra.mxu0 0
    %239 = vmatprep.subr.bf16.mxu0 0
    %240 = vmatpush1.bf16.msra.mxu0 0
    %241 = vmatprep.subr.bf16.mxu0 0
    %242 = vmatpush1.bf16.msra.mxu0 0
    %243 = vmatprep.subr.bf16.mxu0 0
    %244 = vmatpush1.bf16.msra.mxu0 0
    %245 = vmatprep.subr.bf16.mxu0 0
    %246 = vmatpush1.bf16.msra.mxu0 0
    %247 = vmatprep.subr.bf16.mxu0 0
    %248 = vmatpush1.bf16.msra.mxu0 0
    %249 = vmatprep.subr.bf16.mxu0 0
    %250 = vmatpush1.bf16.msra.mxu0 0
    %251 = vmatprep.subr.bf16.mxu0 0
    %252 = vmatpush1.bf16.msra.mxu0 0
    %253 = vmatprep.subr.bf16.mxu0 0
    %254 = vmatpush1.bf16.msra.mxu0 0
    %255 = vmatprep.subr.bf16.mxu0 0
    %256 = vmatpush1.bf16.msra.mxu0 0
    %257 = vmatprep.subr.bf16.mxu0 0
    %258 = vmatpush1.bf16.msra.mxu0 0
    %259 = vmatprep.subr.bf16.mxu0 0
    %260 = vmatpush1.bf16.msra.mxu0 0
    %261 = vmatprep.subr.bf16.mxu0 0
    %262 = vmatpush1.bf16.msra.mxu0 0
    %263 = vmatprep.subr.bf16.mxu0 0
    %264 = vmatpush1.bf16.msra.mxu0 0
    %265 = vmatprep.subr.bf16.mxu0 0
    %266 = vmatpush1.bf16.msra.mxu0 0
    %267 = vmatprep.mubr.bf16.mxu0 0
    %268 = vmatmul.mubr.bf16.gmra.mrb[0].mxu0 %v233
    %v269 = vpop.f32.mrb[0].mxu0
    %v270 = vadd.f32 0.0, %v269
    %v271 = vpop.f32.mrb[0].mxu0
    %v272 = vpop.f32.mrb[0].mxu0
    %v273 = vadd.f32 0.0, %v272
    %v274 = vpop.f32.mrb[0].mxu0
    %275 = vdwg.mxu0
    %v276 = vpack.c.bf16 %v273, %v270
    %277 = vst.msk [vmem:[#allocation2] sm:$0xff] %vm153, %v276
    %278 = vrot.lane.b32.xlu0 %v149, 120
    %v279 = vpop.permute.xlu0 %278
    %280 = vrot.lane.b32.xlu0 %v149, 88
    %v281 = vpop.permute.xlu0 %280
    %v283 = vsel %vm153, %v279, 0
    %v286 = vsel %vm153, %v281, 0
    %288 = vmatprep.subr.bf16.mxu0 0
    %289 = vmatpush1.bf16.xpose.msra.mxu0 %v286
    %290 = vmatprep.subr.bf16.mxu0 0
    %291 = vmatpush1.bf16.xpose.msra.mxu0 0
    %292 = vmatprep.subr.bf16.mxu0 0
    %293 = vmatpush1.bf16.xpose.msra.mxu0 0
    %294 = vmatprep.subr.bf16.mxu0 0
    %295 = vmatpush1.bf16.xpose.msra.mxu0 0
    %296 = vmatprep.subr.bf16.mxu0 0
    %297 = vmatpush1.bf16.xpose.msra.mxu0 0
    %298 = vmatprep.subr.bf16.mxu0 0
    %299 = vmatpush1.bf16.xpose.msra.mxu0 0
    %300 = vmatprep.subr.bf16.mxu0 0
    %301 = vmatpush1.bf16.xpose.msra.mxu0 0
    %302 = vmatprep.subr.bf16.mxu0 0
    %303 = vmatpush1.bf16.xpose.msra.mxu0 0
    %304 = vmatprep.subr.bf16.mxu0 0
    %305 = vmatpush1.bf16.xpose.msra.mxu0 0
    %306 = vmatprep.subr.bf16.mxu0 0
    %307 = vmatpush1.bf16.xpose.msra.mxu0 0
    %308 = vmatprep.subr.bf16.mxu0 0
    %309 = vmatpush1.bf16.xpose.msra.mxu0 0
    %310 = vmatprep.subr.bf16.mxu0 0
    %311 = vmatpush1.bf16.xpose.msra.mxu0 0
    %312 = vmatprep.subr.bf16.mxu0 0
    %313 = vmatpush1.bf16.xpose.msra.mxu0 0
    %314 = vmatprep.subr.bf16.mxu0 0
    %315 = vmatpush1.bf16.xpose.msra.mxu0 0
    %316 = vmatprep.subr.bf16.mxu0 0
    %317 = vmatpush1.bf16.xpose.msra.mxu0 0
    %318 = vmatprep.subr.bf16.mxu0 0
    %319 = vmatpush1.bf16.xpose.msra.mxu0 0
    %320 = vmatprep.mubr.bf16.mxu0 0
    %321 = vmatmul.mubr.bf16.gmra.mrb[0].mxu0 %v283
    %v322 = vpop.f32.mrb[0].mxu0
    %v323 = vadd.f32 0.0, %v322
    %v324 = vpop.f32.mrb[0].mxu0
    %v325 = vpop.f32.mrb[0].mxu0
    %v326 = vadd.f32 0.0, %v325
    %v327 = vpop.f32.mrb[0].mxu0
    %328 = vdwg.mxu0
    %v329 = vmul.f32 %v323, 0.35355338
    %v330 = vmul.f32 %v326, 0.35355338
    %v331 = vadd.f32 %v329, %v35
    %v332 = vadd.f32 %v330, %v36
    %v333 = vsel %vm205, %v331, -inf
    %334 = vmax.xlane.f32.xlu0 %v333
    %v335 = vpop.xlane.xlu0 %334
    %v336 = vsel %vm205, %v332, -inf
    %337 = vmax.xlane.f32.xlu0 %v336
    %v338 = vpop.xlane.xlu0 %337
    %v339 = vsub.f32 %v331, %v335
    %v340 = vsub.f32 %v332, %v338
    %v341 = vmul.f32 %v339, 1.442695
    %v342 = vpow.pop %v341
    %v343 = vmul.f32 %v340, 1.442695
    %v344 = vpow.pop %v343
    %v345 = vsel %vm205, %v342, 0.0
    %346 = vadd.xlane.f32.xlu0 %v345
    %v347 = vpop.xlane.xlu0 %346
    %v348 = vsel %vm205, %v344, 0.0
    %349 = vadd.xlane.f32.xlu0 %v348
    %v350 = vpop.xlane.xlu0 %349
    %v351 = vrcp.pop %v347
    %v352 = vrcp.pop %v350
    %v353 = vmul.f32 %v342, %v351
    %v354 = vmul.f32 %v344, %v352
    %v355 = vpack.c.bf16 %v354, %v353
    %356 = vrot.lane.b32.xlu0 %v149, 56
    %v357 = vpop.permute.xlu0 %356
    %v360 = vsel %vm205, %v355, 0
    %362 = vmatprep.subr.bf16.mxu0 0
    %363 = vmatpush1.bf16.msra.mxu0 %v357
    %364 = vmatprep.subr.bf16.mxu0 0
    %365 = vmatpush1.bf16.msra.mxu0 0
    %366 = vmatprep.subr.bf16.mxu0 0
    %367 = vmatpush1.bf16.msra.mxu0 0
    %368 = vmatprep.subr.bf16.mxu0 0
    %369 = vmatpush1.bf16.msra.mxu0 0
    %370 = vmatprep.subr.bf16.mxu0 0
    %371 = vmatpush1.bf16.msra.mxu0 0
    %372 = vmatprep.subr.bf16.mxu0 0
    %373 = vmatpush1.bf16.msra.mxu0 0
    %374 = vmatprep.subr.bf16.mxu0 0
    %375 = vmatpush1.bf16.msra.mxu0 0
    %376 = vmatprep.subr.bf16.mxu0 0
    %377 = vmatpush1.bf16.msra.mxu0 0
    %378 = vmatprep.subr.bf16.mxu0 0
    %379 = vmatpush1.bf16.msra.mxu0 0
    %380 = vmatprep.subr.bf16.mxu0 0
    %381 = vmatpush1.bf16.msra.mxu0 0
    %382 = vmatprep.subr.bf16.mxu0 0
    %383 = vmatpush1.bf16.msra.mxu0 0
    %384 = vmatprep.subr.bf16.mxu0 0
    %385 = vmatpush1.bf16.msra.mxu0 0
    %386 = vmatprep.subr.bf16.mxu0 0
    %387 = vmatpush1.bf16.msra.mxu0 0
    %388 = vmatprep.subr.bf16.mxu0 0
    %389 = vmatpush1.bf16.msra.mxu0 0
    %390 = vmatprep.subr.bf16.mxu0 0
    %391 = vmatpush1.bf16.msra.mxu0 0
    %392 = vmatprep.subr.bf16.mxu0 0
    %393 = vmatpush1.bf16.msra.mxu0 0
    %394 = vmatprep.mubr.bf16.mxu0 0
    %395 = vmatmul.mubr.bf16.gmra.mrb[0].mxu0 %v360
    %v396 = vpop.f32.mrb[0].mxu0
    %v397 = vadd.f32 0.0, %v396
    %v398 = vpop.f32.mrb[0].mxu0
    %v399 = vpop.f32.mrb[0].mxu0
    %v400 = vadd.f32 0.0, %v399
    %v401 = vpop.f32.mrb[0].mxu0
    %402 = vdwg.mxu0
    %v403 = vpack.c.bf16 %v400, %v397
    %405 = vrot.lane.b32.xlu0 %v403, 8
    %v406 = vpop.permute.xlu0 %405
    %vm408 = vcmask 130112
    %409 = vst.msk [vmem:[#allocation2] sm:$0xff] %vm408, %v406
    %410 = vrot.lane.b32.xlu0 %v149, 112
    %v411 = vpop.permute.xlu0 %410
    %412 = vrot.lane.b32.xlu0 %v149, 80
    %v413 = vpop.permute.xlu0 %412
    %v415 = vsel %vm153, %v411, 0
    %v418 = vsel %vm153, %v413, 0
    %420 = vmatprep.subr.bf16.mxu0 0
    %421 = vmatpush1.bf16.xpose.msra.mxu0 %v418
    %422 = vmatprep.subr.bf16.mxu0 0
    %423 = vmatpush1.bf16.xpose.msra.mxu0 0
    %424 = vmatprep.subr.bf16.mxu0 0
    %425 = vmatpush1.bf16.xpose.msra.mxu0 0
    %426 = vmatprep.subr.bf16.mxu0 0
    %427 = vmatpush1.bf16.xpose.msra.mxu0 0
    %428 = vmatprep.subr.bf16.mxu0 0
    %429 = vmatpush1.bf16.xpose.msra.mxu0 0
    %430 = vmatprep.subr.bf16.mxu0 0
    %431 = vmatpush1.bf16.xpose.msra.mxu0 0
    %432 = vmatprep.subr.bf16.mxu0 0
    %433 = vmatpush1.bf16.xpose.msra.mxu0 0
    %434 = vmatprep.subr.bf16.mxu0 0
    %435 = vmatpush1.bf16.xpose.msra.mxu0 0
    %436 = vmatprep.subr.bf16.mxu0 0
    %437 = vmatpush1.bf16.xpose.msra.mxu0 0
    %438 = vmatprep.subr.bf16.mxu0 0
    %439 = vmatpush1.bf16.xpose.msra.mxu0 0
    %440 = vmatprep.subr.bf16.mxu0 0
    %441 = vmatpush1.bf16.xpose.msra.mxu0 0
    %442 = vmatprep.subr.bf16.mxu0 0
    %443 = vmatpush1.bf16.xpose.msra.mxu0 0
    %444 = vmatprep.subr.bf16.mxu0 0
    %445 = vmatpush1.bf16.xpose.msra.mxu0 0
    %446 = vmatprep.subr.bf16.mxu0 0
    %447 = vmatpush1.bf16.xpose.msra.mxu0 0
    %448 = vmatprep.subr.bf16.mxu0 0
    %449 = vmatpush1.bf16.xpose.msra.mxu0 0
    %450 = vmatprep.subr.bf16.mxu0 0
    %451 = vmatpush1.bf16.xpose.msra.mxu0 0
    %452 = vmatprep.mubr.bf16.mxu0 0
    %453 = vmatmul.mubr.bf16.gmra.mrb[0].mxu0 %v415
    %v454 = vpop.f32.mrb[0].mxu0
    %v455 = vadd.f32 0.0, %v454
    %v456 = vpop.f32.mrb[0].mxu0
    %v457 = vpop.f32.mrb[0].mxu0
    %v458 = vadd.f32 0.0, %v457
    %v459 = vpop.f32.mrb[0].mxu0
    %460 = vdwg.mxu0
    %v461 = vmul.f32 %v455, 0.35355338
    %v462 = vmul.f32 %v458, 0.35355338
    %v463 = vadd.f32 %v461, %v35
    %v464 = vadd.f32 %v462, %v36
    %v465 = vsel %vm205, %v463, -inf
    %466 = vmax.xlane.f32.xlu0 %v465
    %v467 = vpop.xlane.xlu0 %466
    %v468 = vsel %vm205, %v464, -inf
    %469 = vmax.xlane.f32.xlu0 %v468
    %v470 = vpop.xlane.xlu0 %469
    %v471 = vsub.f32 %v463, %v467
    %v472 = vsub.f32 %v464, %v470
    %v473 = vmul.f32 %v471, 1.442695
    %v474 = vpow.pop %v473
    %v475 = vmul.f32 %v472, 1.442695
    %v476 = vpow.pop %v475
    %v477 = vsel %vm205, %v474, 0.0
    %478 = vadd.xlane.f32.xlu0 %v477
    %v479 = vpop.xlane.xlu0 %478
    %v480 = vsel %vm205, %v476, 0.0
    %481 = vadd.xlane.f32.xlu0 %v480
    %v482 = vpop.xlane.xlu0 %481
    %v483 = vrcp.pop %v479
    %v484 = vrcp.pop %v482
    %v485 = vmul.f32 %v474, %v483
    %v486 = vmul.f32 %v476, %v484
    %v487 = vpack.c.bf16 %v486, %v485
    %488 = vrot.lane.b32.xlu0 %v149, 48
    %v489 = vpop.permute.xlu0 %488
    %v492 = vsel %vm205, %v487, 0
    %494 = vmatprep.subr.bf16.mxu0 0
    %495 = vmatpush1.bf16.msra.mxu0 %v489
    %496 = vmatprep.subr.bf16.mxu0 0
    %497 = vmatpush1.bf16.msra.mxu0 0
    %498 = vmatprep.subr.bf16.mxu0 0
    %499 = vmatpush1.bf16.msra.mxu0 0
    %500 = vmatprep.subr.bf16.mxu0 0
    %501 = vmatpush1.bf16.msra.mxu0 0
    %502 = vmatprep.subr.bf16.mxu0 0
    %503 = vmatpush1.bf16.msra.mxu0 0
    %504 = vmatprep.subr.bf16.mxu0 0
    %505 = vmatpush1.bf16.msra.mxu0 0
    %506 = vmatprep.subr.bf16.mxu0 0
    %507 = vmatpush1.bf16.msra.mxu0 0
    %508 = vmatprep.subr.bf16.mxu0 0
    %509 = vmatpush1.bf16.msra.mxu0 0
    %510 = vmatprep.subr.bf16.mxu0 0
    %511 = vmatpush1.bf16.msra.mxu0 0
    %512 = vmatprep.subr.bf16.mxu0 0
    %513 = vmatpush1.bf16.msra.mxu0 0
    %514 = vmatprep.subr.bf16.mxu0 0
    %515 = vmatpush1.bf16.msra.mxu0 0
    %516 = vmatprep.subr.bf16.mxu0 0
    %517 = vmatpush1.bf16.msra.mxu0 0
    %518 = vmatprep.subr.bf16.mxu0 0
    %519 = vmatpush1.bf16.msra.mxu0 0
    %520 = vmatprep.subr.bf16.mxu0 0
    %521 = vmatpush1.bf16.msra.mxu0 0
    %522 = vmatprep.subr.bf16.mxu0 0
    %523 = vmatpush1.bf16.msra.mxu0 0
    %524 = vmatprep.subr.bf16.mxu0 0
    %525 = vmatpush1.bf16.msra.mxu0 0
    %526 = vmatprep.mubr.bf16.mxu0 0
    %527 = vmatmul.mubr.bf16.gmra.mrb[0].mxu0 %v492
    %v528 = vpop.f32.mrb[0].mxu0
    %v529 = vadd.f32 0.0, %v528
    %v530 = vpop.f32.mrb[0].mxu0
    %v531 = vpop.f32.mrb[0].mxu0
    %v532 = vadd.f32 0.0, %v531
    %v533 = vpop.f32.mrb[0].mxu0
    %534 = vdwg.mxu0
    %v535 = vpack.c.bf16 %v532, %v529
    %537 = vrot.lane.b32.xlu0 %v535, 16
    %v538 = vpop.permute.xlu0 %537
    %vm540 = vcmask 195712
    %541 = vst.msk [vmem:[#allocation2] sm:$0xff] %vm540, %v538
    %542 = vrot.lane.b32.xlu0 %v149, 104
    %v543 = vpop.permute.xlu0 %542
    %544 = vrot.lane.b32.xlu0 %v149, 72
    %v545 = vpop.permute.xlu0 %544
    %v547 = vsel %vm153, %v543, 0
    %v550 = vsel %vm153, %v545, 0
    %552 = vmatprep.subr.bf16.mxu0 0
    %553 = vmatpush1.bf16.xpose.msra.mxu0 %v550
    %554 = vmatprep.subr.bf16.mxu0 0
    %555 = vmatpush1.bf16.xpose.msra.mxu0 0
    %556 = vmatprep.subr.bf16.mxu0 0
    %557 = vmatpush1.bf16.xpose.msra.mxu0 0
    %558 = vmatprep.subr.bf16.mxu0 0
    %559 = vmatpush1.bf16.xpose.msra.mxu0 0
    %560 = vmatprep.subr.bf16.mxu0 0
    %561 = vmatpush1.bf16.xpose.msra.mxu0 0
    %562 = vmatprep.subr.bf16.mxu0 0
    %563 = vmatpush1.bf16.xpose.msra.mxu0 0
    %564 = vmatprep.subr.bf16.mxu0 0
    %565 = vmatpush1.bf16.xpose.msra.mxu0 0
    %566 = vmatprep.subr.bf16.mxu0 0
    %567 = vmatpush1.bf16.xpose.msra.mxu0 0
    %568 = vmatprep.subr.bf16.mxu0 0
    %569 = vmatpush1.bf16.xpose.msra.mxu0 0
    %570 = vmatprep.subr.bf16.mxu0 0
    %571 = vmatpush1.bf16.xpose.msra.mxu0 0
    %572 = vmatprep.subr.bf16.mxu0 0
    %573 = vmatpush1.bf16.xpose.msra.mxu0 0
    %574 = vmatprep.subr.bf16.mxu0 0
    %575 = vmatpush1.bf16.xpose.msra.mxu0 0
    %576 = vmatprep.subr.bf16.mxu0 0
    %577 = vmatpush1.bf16.xpose.msra.mxu0 0
    %578 = vmatprep.subr.bf16.mxu0 0
    %579 = vmatpush1.bf16.xpose.msra.mxu0 0
    %580 = vmatprep.subr.bf16.mxu0 0
    %581 = vmatpush1.bf16.xpose.msra.mxu0 0
    %582 = vmatprep.subr.bf16.mxu0 0
    %583 = vmatpush1.bf16.xpose.msra.mxu0 0
    %584 = vmatprep.mubr.bf16.mxu0 0
    %585 = vmatmul.mubr.bf16.gmra.mrb[0].mxu0 %v547
    %v586 = vpop.f32.mrb[0].mxu0
    %v587 = vadd.f32 0.0, %v586
    %v588 = vpop.f32.mrb[0].mxu0
    %v589 = vpop.f32.mrb[0].mxu0
    %v590 = vadd.f32 0.0, %v589
    %v591 = vpop.f32.mrb[0].mxu0
    %592 = vdwg.mxu0
    %v593 = vmul.f32 %v587, 0.35355338
    %v594 = vmul.f32 %v590, 0.35355338
    %v595 = vadd.f32 %v593, %v35
    %v596 = vadd.f32 %v594, %v36
    %v597 = vsel %vm205, %v595, -inf
    %598 = vmax.xlane.f32.xlu0 %v597
    %v599 = vpop.xlane.xlu0 %598
    %v600 = vsel %vm205, %v596, -inf
    %601 = vmax.xlane.f32.xlu0 %v600
    %v602 = vpop.xlane.xlu0 %601
    %v603 = vsub.f32 %v595, %v599
    %v604 = vsub.f32 %v596, %v602
    %v605 = vmul.f32 %v603, 1.442695
    %v606 = vpow.pop %v605
    %v607 = vmul.f32 %v604, 1.442695
    %v608 = vpow.pop %v607
    %v609 = vsel %vm205, %v606, 0.0
    %610 = vadd.xlane.f32.xlu0 %v609
    %v611 = vpop.xlane.xlu0 %610
    %v612 = vsel %vm205, %v608, 0.0
    %613 = vadd.xlane.f32.xlu0 %v612
    %v614 = vpop.xlane.xlu0 %613
    %v615 = vrcp.pop %v611
    %v616 = vrcp.pop %v614
    %v617 = vmul.f32 %v606, %v615
    %v618 = vmul.f32 %v608, %v616
    %v619 = vpack.c.bf16 %v618, %v617
    %620 = vrot.lane.b32.xlu0 %v149, 40
    %v621 = vpop.permute.xlu0 %620
    %v624 = vsel %vm205, %v619, 0
    %626 = vmatprep.subr.bf16.mxu0 0
    %627 = vmatpush1.bf16.msra.mxu0 %v621
    %628 = vmatprep.subr.bf16.mxu0 0
    %629 = vmatpush1.bf16.msra.mxu0 0
    %630 = vmatprep.subr.bf16.mxu0 0
    %631 = vmatpush1.bf16.msra.mxu0 0
    %632 = vmatprep.subr.bf16.mxu0 0
    %633 = vmatpush1.bf16.msra.mxu0 0
    %634 = vmatprep.subr.bf16.mxu0 0
    %635 = vmatpush1.bf16.msra.mxu0 0
    %636 = vmatprep.subr.bf16.mxu0 0
    %637 = vmatpush1.bf16.msra.mxu0 0
    %638 = vmatprep.subr.bf16.mxu0 0
    %639 = vmatpush1.bf16.msra.mxu0 0
    %640 = vmatprep.subr.bf16.mxu0 0
    %641 = vmatpush1.bf16.msra.mxu0 0
    %642 = vmatprep.subr.bf16.mxu0 0
    %643 = vmatpush1.bf16.msra.mxu0 0
    %644 = vmatprep.subr.bf16.mxu0 0
    %645 = vmatpush1.bf16.msra.mxu0 0
    %646 = vmatprep.subr.bf16.mxu0 0
    %647 = vmatpush1.bf16.msra.mxu0 0
    %648 = vmatprep.subr.bf16.mxu0 0
    %649 = vmatpush1.bf16.msra.mxu0 0
    %650 = vmatprep.subr.bf16.mxu0 0
    %651 = vmatpush1.bf16.msra.mxu0 0
    %652 = vmatprep.subr.bf16.mxu0 0
    %653 = vmatpush1.bf16.msra.mxu0 0
    %654 = vmatprep.subr.bf16.mxu0 0
    %655 = vmatpush1.bf16.msra.mxu0 0
    %656 = vmatprep.subr.bf16.mxu0 0
    %657 = vmatpush1.bf16.msra.mxu0 0
    %658 = vmatprep.mubr.bf16.mxu0 0
    %659 = vmatmul.mubr.bf16.gmra.mrb[0].mxu0 %v624
    %v660 = vpop.f32.mrb[0].mxu0
    %v661 = vadd.f32 0.0, %v660
    %v662 = vpop.f32.mrb[0].mxu0
    %v663 = vpop.f32.mrb[0].mxu0
    %v664 = vadd.f32 0.0, %v663
    %v665 = vpop.f32.mrb[0].mxu0
    %666 = vdwg.mxu0
    %v667 = vpack.c.bf16 %v664, %v661
    %669 = vrot.lane.b32.xlu0 %v667, 24
    %v670 = vpop.permute.xlu0 %669
    %vm672 = vcmask 261312
    %673 = vst.msk [vmem:[#allocation2] sm:$0xff] %vm672, %v670
    %v674 = vld [vmem:[%s2] sm:$0xf]
    %v675 = vld [vmem:[%s2 + $0x4] sm:$0xf]
    %v676 = vld [vmem:[%s2 + $0x8] sm:$0xf]
    %v677 = vld [vmem:[%s2 + $0xc] sm:$0xf]
    %v678 = vld [vmem:[#allocation2] sm:$0xff]
    %v679 = vld [vmem:[%s4 + $0x1] sm:$0x1]
    %v680 = vlaneseq
    %v681 = vshrl.u32 %v680, 7
    %v682 = vsub.s32 0, %v681
    %v683 = vrot.slane %v679, %v682
    %v688 = vunpack.c.l.b16 %v674
    %v689 = vunpack.c.l.b16 %v675
    %v690 = vunpack.c.l.b16 %v676
    %v691 = vunpack.c.l.b16 %v677
    %v692 = vpack.c.b16 %v689, %v688
    %v693 = vpack.c.b16 %v691, %v690
    %694 = vrot.lane.b32.xlu0 %v692, 32
    %v695 = vpop.permute.xlu0 %694
    %696 = vrot.lane.b32.xlu0 %v693, 32
    %v697 = vpop.permute.xlu0 %696
    %v701 = vsel %vm41, %v678, 0
    %703 = vmatprep.subr.bf16.mxu0 0
    %704 = vmatpush1.bf16.msra.mxu0 %v695
    %705 = vmatprep.subr.bf16.mxu0 0
    %706 = vmatpush1.bf16.msra.mxu0 %v697
    %707 = vmatprep.subr.bf16.mxu0 0
    %708 = vmatpush1.bf16.msra.mxu0 0
    %709 = vmatprep.subr.bf16.mxu0 0
    %710 = vmatpush1.bf16.msra.mxu0 0
    %711 = vmatprep.subr.bf16.mxu0 0
    %712 = vmatpush1.bf16.msra.mxu0 0
    %713 = vmatprep.subr.bf16.mxu0 0
    %714 = vmatpush1.bf16.msra.mxu0 0
    %715 = vmatprep.subr.bf16.mxu0 0
    %716 = vmatpush1.bf16.msra.mxu0 0
    %717 = vmatprep.subr.bf16.mxu0 0
    %718 = vmatpush1.bf16.msra.mxu0 0
    %719 = vmatprep.subr.bf16.mxu0 0
    %720 = vmatpush1.bf16.msra.mxu0 0
    %721 = vmatprep.subr.bf16.mxu0 0
    %722 = vmatpush1.bf16.msra.mxu0 0
    %723 = vmatprep.subr.bf16.mxu0 0
    %724 = vmatpush1.bf16.msra.mxu0 0
    %725 = vmatprep.subr.bf16.mxu0 0
    %726 = vmatpush1.bf16.msra.mxu0 0
    %727 = vmatprep.subr.bf16.mxu0 0
    %728 = vmatpush1.bf16.msra.mxu0 0
    %729 = vmatprep.subr.bf16.mxu0 0
    %730 = vmatpush1.bf16.msra.mxu0 0
    %731 = vmatprep.subr.bf16.mxu0 0
    %732 = vmatpush1.bf16.msra.mxu0 0
    %733 = vmatprep.subr.bf16.mxu0 0
    %734 = vmatpush1.bf16.msra.mxu0 0
    %735 = vmatprep.mubr.bf16.mxu0 0
    %736 = vmatmul.mubr.bf16.gmra.mrb[0].mxu0 %v701
    %v737 = vpop.f32.mrb[0].mxu0
    %v738 = vadd.f32 %v683, %v737
    %v739 = vpop.f32.mrb[0].mxu0
    %v740 = vpop.f32.mrb[0].mxu0
    %v741 = vadd.f32 %v683, %v740
    %v742 = vpop.f32.mrb[0].mxu0
    %743 = vdwg.mxu0
    %v744 = vadd.f32 %v79, %v738
    %v745 = vadd.f32 %v80, %v741
    %v746 = vld [vmem:[%s4 + $0x2] sm:$0x1]
    %v747 = vld [vmem:[%s4 + $0x3] sm:$0x1]
    %v748 = vsel %vm41, %v744, 0.0
    %749 = vadd.xlane.f32.xlu0 %v748
    %v750 = vpop.xlane.xlu0 %749
    %v751 = vsel %vm41, %v745, 0.0
    %752 = vadd.xlane.f32.xlu0 %v751
    %v753 = vpop.xlane.xlu0 %752
    %v754 = vmul.f32 %v750, %v48
    %v755 = vmul.f32 %v753, %v48
    %v756 = vsub.f32 %v744, %v754
    %v757 = vsub.f32 %v745, %v755
    %v758 = vmul.f32 %v756, %v756
    %v759 = vmul.f32 %v757, %v757
    %v760 = vsel %vm41, %v758, 0.0
    %761 = vadd.xlane.f32.xlu0 %v760
    %v762 = vpop.xlane.xlu0 %761
    %v763 = vsel %vm41, %v759, 0.0
    %764 = vadd.xlane.f32.xlu0 %v763
    %v765 = vpop.xlane.xlu0 %764
    %v766 = vmul.f32 %v762, %v48
    %v767 = vmul.f32 %v765, %v48
    %v768 = vadd.f32 %v766, 1e-12
    %v769 = vadd.f32 %v767, 1e-12
    %v770 = vrsqrt.pop %v768
    %v771 = vrsqrt.pop %v769
    %v772 = vmul.f32 %v756, %v770
    %v773 = vmul.f32 %v757, %v771
    %v774 = vlaneseq
    %v775 = vshrl.u32 %v774, 7
    %v776 = vsub.s32 0, %v775
    %v777 = vrot.slane %v746, %v776
    %v778 = vmul.f32 %v772, %v777
    %v779 = vmul.f32 %v773, %v777
    %v780 = vlaneseq
    %v781 = vshrl.u32 %v780, 7
    %v782 = vsub.s32 0, %v781
    %v783 = vrot.slane %v747, %v782
    %v784 = vadd.f32 %v778, %v783
    %v785 = vadd.f32 %v779, %v783
    %v786 = vld [vmem:[%s2 + $0x10] sm:$0xf]
    %v787 = vld [vmem:[%s2 + $0x14] sm:$0xf]
    %v788 = vld [vmem:[%s2 + $0x18] sm:$0xf]
    %v789 = vld [vmem:[%s2 + $0x1c] sm:$0xf]
    %v790 = vpack.c.bf16 %v785, %v784
    %v791 = vld [vmem:[%s4 + $0x4] sm:$0x1]
    %v792 = vlaneseq
    %v793 = vshrl.u32 %v792, 7
    %v794 = vsub.s32 0, %v793
    %v795 = vrot.slane %v791, %v794
    %v800 = vunpack.c.l.b16 %v786
    %v801 = vunpack.c.l.b16 %v787
    %v802 = vunpack.c.l.b16 %v788
    %v803 = vunpack.c.l.b16 %v789
    %v804 = vpack.c.b16 %v801, %v800
    %v805 = vpack.c.b16 %v803, %v802
    %v809 = vsel %vm41, %v790, 0
    %811 = vmatprep.subr.bf16.mxu0 0
    %812 = vmatpush1.bf16.msra.mxu0 %v804
    %813 = vmatprep.subr.bf16.mxu0 0
    %814 = vmatpush1.bf16.msra.mxu0 %v805
    %815 = vmatprep.subr.bf16.mxu0 0
    %816 = vmatpush1.bf16.msra.mxu0 0
    %817 = vmatprep.subr.bf16.mxu0 0
    %818 = vmatpush1.bf16.msra.mxu0 0
    %819 = vmatprep.subr.bf16.mxu0 0
    %820 = vmatpush1.bf16.msra.mxu0 0
    %821 = vmatprep.subr.bf16.mxu0 0
    %822 = vmatpush1.bf16.msra.mxu0 0
    %823 = vmatprep.subr.bf16.mxu0 0
    %824 = vmatpush1.bf16.msra.mxu0 0
    %825 = vmatprep.subr.bf16.mxu0 0
    %826 = vmatpush1.bf16.msra.mxu0 0
    %827 = vmatprep.subr.bf16.mxu0 0
    %828 = vmatpush1.bf16.msra.mxu0 0
    %829 = vmatprep.subr.bf16.mxu0 0
    %830 = vmatpush1.bf16.msra.mxu0 0
    %831 = vmatprep.subr.bf16.mxu0 0
    %832 = vmatpush1.bf16.msra.mxu0 0
    %833 = vmatprep.subr.bf16.mxu0 0
    %834 = vmatpush1.bf16.msra.mxu0 0
    %835 = vmatprep.subr.bf16.mxu0 0
    %836 = vmatpush1.bf16.msra.mxu0 0
    %837 = vmatprep.subr.bf16.mxu0 0
    %838 = vmatpush1.bf16.msra.mxu0 0
    %839 = vmatprep.subr.bf16.mxu0 0
    %840 = vmatpush1.bf16.msra.mxu0 0
    %841 = vmatprep.subr.bf16.mxu0 0
    %842 = vmatpush1.bf16.msra.mxu0 0
    %843 = vmatprep.mubr.bf16.mxu0 0
    %844 = vmatmul.mubr.bf16.gmra.mrb[0].mxu0 %v809
    %v845 = vpop.f32.mrb[0].mxu0
    %v846 = vadd.f32 %v795, %v845
    %v847 = vpop.f32.mrb[0].mxu0
    %v848 = vpop.f32.mrb[0].mxu0
    %v849 = vadd.f32 %v795, %v848
    %v850 = vpop.f32.mrb[0].mxu0
    %851 = vdwg.mxu0
    %v852 = vmul.f32 %v846, 0.5
    %v853 = vmul.f32 %v849, 0.5
    %v854 = vmul.f32 %v846, 0.044715
    %v855 = vmul.f32 %v849, 0.044715
    %v856 = vmul.f32 %v854, %v846
    %v857 = vmul.f32 %v855, %v849
    %v858 = vmul.f32 %v856, %v846
    %v859 = vmul.f32 %v857, %v849
    %v860 = vadd.f32 %v846, %v858
    %v861 = vadd.f32 %v849, %v859
    %v862 = vmul.f32 %v860, 0.7978846
    %v863 = vmul.f32 %v861, 0.7978846
    %v864 = vtanh.pop %v862
    %v865 = vtanh.pop %v863
    %v866 = vadd.f32 %v864, 1.0
    %v867 = vadd.f32 %v865, 1.0
    %v868 = vmul.f32 %v852, %v866
    %v869 = vmul.f32 %v853, %v867
    %v870 = vpack.c.bf16 %v869, %v868
    %v871 = vld [vmem:[%s3] sm:$0xf]
    %v872 = vld [vmem:[%s3 + $0x4] sm:$0xf]
    %v873 = vld [vmem:[%s3 + $0x8] sm:$0xf]
    %v874 = vld [vmem:[%s3 + $0xc] sm:$0xf]
    %v875 = vld [vmem:[%s3 + $0x10] sm:$0xf]
    %v876 = vld [vmem:[%s3 + $0x14] sm:$0xf]
    %v877 = vld [vmem:[%s3 + $0x18] sm:$0xf]
    %v878 = vld [vmem:[%s3 + $0x1c] sm:$0xf]
    %v879 = vld [vmem:[%s3 + $0x20] sm:$0xf]
    %v880 = vld [vmem:[%s3 + $0x24] sm:$0xf]
    %v881 = vld [vmem:[%s3 + $0x28] sm:$0xf]
    %v882 = vld [vmem:[%s3 + $0x2c] sm:$0xf]
    %v883 = vld [vmem:[%s3 + $0x30] sm:$0xf]
    %v884 = vld [vmem:[%s3 + $0x34] sm:$0xf]
    %v885 = vld [vmem:[%s3 + $0x38] sm:$0xf]
    %v886 = vld [vmem:[%s3 + $0x3c] sm:$0xf]
    %v887 = vld [vmem:[%s4 + $0x5] sm:$0x1]
    %v888 = vlaneseq
    %v889 = vshrl.u32 %v888, 7
    %v890 = vsub.s32 0, %v889
    %v891 = vrot.slane %v887, %v890
    %v908 = vunpack.c.l.b16 %v871
    %v909 = vunpack.c.l.b16 %v872
    %v910 = vunpack.c.l.b16 %v873
    %v911 = vunpack.c.l.b16 %v874
    %v912 = vunpack.c.l.b16 %v875
    %v913 = vunpack.c.l.b16 %v876
    %v914 = vunpack.c.l.b16 %v877
    %v915 = vunpack.c.l.b16 %v878
    %v916 = vunpack.c.l.b16 %v879
    %v917 = vunpack.c.l.b16 %v880
    %v918 = vunpack.c.l.b16 %v881
    %v919 = vunpack.c.l.b16 %v882
    %v920 = vunpack.c.l.b16 %v883
    %v921 = vunpack.c.l.b16 %v884
    %v922 = vunpack.c.l.b16 %v885
    %v923 = vunpack.c.l.b16 %v886
    %v924 = vpack.c.b16 %v909, %v908
    %v925 = vpack.c.b16 %v911, %v910
    %v926 = vpack.c.b16 %v913, %v912
    %v927 = vpack.c.b16 %v915, %v914
    %v928 = vpack.c.b16 %v917, %v916
    %v929 = vpack.c.b16 %v919, %v918
    %v930 = vpack.c.b16 %v921, %v920
    %v931 = vpack.c.b16 %v923, %v922
    %940 = vmatprep.subr.bf16.mxu0 0
    %941 = vmatpush1.bf16.msra.mxu0 %v924
    %942 = vmatprep.subr.bf16.mxu0 0
    %943 = vmatpush1.bf16.msra.mxu0 %v925
    %944 = vmatprep.subr.bf16.mxu0 0
    %945 = vmatpush1.bf16.msra.mxu0 %v926
    %946 = vmatprep.subr.bf16.mxu0 0
    %947 = vmatpush1.bf16.msra.mxu0 %v927
    %948 = vmatprep.subr.bf16.mxu0 0
    %949 = vmatpush1.bf16.msra.mxu0 %v928
    %950 = vmatprep.subr.bf16.mxu0 0
    %951 = vmatpush1.bf16.msra.mxu0 %v929
    %952 = vmatprep.subr.bf16.mxu0 0
    %953 = vmatpush1.bf16.msra.mxu0 %v930
    %954 = vmatprep.subr.bf16.mxu0 0
    %955 = vmatpush1.bf16.msra.mxu0 %v931
    %956 = vmatprep.subr.bf16.mxu0 0
    %957 = vmatpush1.bf16.msra.mxu0 0
    %958 = vmatprep.subr.bf16.mxu0 0
    %959 = vmatpush1.bf16.msra.mxu0 0
    %960 = vmatprep.subr.bf16.mxu0 0
    %961 = vmatpush1.bf16.msra.mxu0 0
    %962 = vmatprep.subr.bf16.mxu0 0
    %963 = vmatpush1.bf16.msra.mxu0 0
    %964 = vmatprep.subr.bf16.mxu0 0
    %965 = vmatpush1.bf16.msra.mxu0 0
    %966 = vmatprep.subr.bf16.mxu0 0
    %967 = vmatpush1.bf16.msra.mxu0 0
    %968 = vmatprep.subr.bf16.mxu0 0
    %969 = vmatpush1.bf16.msra.mxu0 0
    %970 = vmatprep.subr.bf16.mxu0 0
    %971 = vmatpush1.bf16.msra.mxu0 0
    %972 = vmatprep.mubr.bf16.mxu0 0
    %973 = vmatmul.mubr.bf16.gmra.mrb[0].mxu0 %v870
    %v974 = vpop.f32.mrb[0].mxu0
    %v975 = vadd.f32 %v891, %v974
    %v976 = vpop.f32.mrb[0].mxu0
    %v977 = vpop.f32.mrb[0].mxu0
    %v978 = vadd.f32 %v891, %v977
    %v979 = vpop.f32.mrb[0].mxu0
    %980 = vdwg.mxu0
    %v981 = vadd.f32 %v784, %v975
    %v982 = vadd.f32 %v785, %v978
    %v983 = vld [vmem:[%s4 + $0x6] sm:$0x1]
    %v984 = vld [vmem:[%s4 + $0x7] sm:$0x1]
    %v985 = vsel %vm41, %v981, 0.0
    %986 = vadd.xlane.f32.xlu0 %v985
    %v987 = vpop.xlane.xlu0 %986
    %v988 = vsel %vm41, %v982, 0.0
    %989 = vadd.xlane.f32.xlu0 %v988
    %v990 = vpop.xlane.xlu0 %989
    %v991 = vmul.f32 %v987, %v48
    %v992 = vmul.f32 %v990, %v48
    %v993 = vsub.f32 %v981, %v991
    %v994 = vsub.f32 %v982, %v992
    %v995 = vmul.f32 %v993, %v993
    %v996 = vmul.f32 %v994, %v994
    %v997 = vsel %vm41, %v995, 0.0
    %998 = vadd.xlane.f32.xlu0 %v997
    %v999 = vpop.xlane.xlu0 %998
    %v1000 = vsel %vm41, %v996, 0.0
    %1001 = vadd.xlane.f32.xlu0 %v1000
    %v1002 = vpop.xlane.xlu0 %1001
    %v1003 = vmul.f32 %v999, %v48
    %v1004 = vmul.f32 %v1002, %v48
    %v1005 = vadd.f32 %v1003, 1e-12
    %v1006 = vadd.f32 %v1004, 1e-12
    %v1007 = vrsqrt.pop %v1005
    %v1008 = vrsqrt.pop %v1006
    %v1009 = vmul.f32 %v993, %v1007
    %v1010 = vmul.f32 %v994, %v1008
    %v1011 = vlaneseq
    %v1012 = vshrl.u32 %v1011, 7
    %v1013 = vsub.s32 0, %v1012
    %v1014 = vrot.slane %v983, %v1013
    %v1015 = vmul.f32 %v1009, %v1014
    %v1016 = vmul.f32 %v1010, %v1014
    %v1017 = vlaneseq
    %v1018 = vshrl.u32 %v1017, 7
    %v1019 = vsub.s32 0, %v1018
    %v1020 = vrot.slane %v984, %v1019
    %v1021 = vadd.f32 %v1015, %v1020
    %v1022 = vadd.f32 %v1016, %v1020
    %s1023 = scalar_lea.vmem %s2, 32
    %v1024 = vld [vmem:[%s1023] sm:$0xf]
    %v1025 = vld [vmem:[%s1023 + $0x4] sm:$0xf]
    %v1026 = vld [vmem:[%s1023 + $0x8] sm:$0xf]
    %v1027 = vld [vmem:[%s1023 + $0xc] sm:$0xf]
    %v1028 = vpack.c.bf16 %v1022, %v1021
    %v1033 = vunpack.c.l.b16 %v1024
    %v1034 = vunpack.c.l.b16 %v1025
    %v1035 = vunpack.c.l.b16 %v1026
    %v1036 = vunpack.c.l.b16 %v1027
    %v1037 = vpack.c.b16 %v1034, %v1033
    %v1038 = vpack.c.b16 %v1036, %v1035
    %v1042 = vsel %vm41, %v1028, 0
    %1044 = vmatprep.subr.bf16.mxu0 0
    %1045 = vmatpush1.bf16.msra.mxu0 %v1037
    %1046 = vmatprep.subr.bf16.mxu0 0
    %1047 = vmatpush1.bf16.msra.mxu0 %v1038
    %1048 = vmatprep.subr.bf16.mxu0 0
    %1049 = vmatpush1.bf16.msra.mxu0 0
    %1050 = vmatprep.subr.bf16.mxu0 0
    %1051 = vmatpush1.bf16.msra.mxu0 0
    %1052 = vmatprep.subr.bf16.mxu0 0
    %1053 = vmatpush1.bf16.msra.mxu0 0
    %1054 = vmatprep.subr.bf16.mxu0 0
    %1055 = vmatpush1.bf16.msra.mxu0 0
    %1056 = vmatprep.subr.bf16.mxu0 0
    %1057 = vmatpush1.bf16.msra.mxu0 0
    %1058 = vmatprep.subr.bf16.mxu0 0
    %1059 = vmatpush1.bf16.msra.mxu0 0
    %1060 = vmatprep.subr.bf16.mxu0 0
    %1061 = vmatpush1.bf16.msra.mxu0 0
    %1062 = vmatprep.subr.bf16.mxu0 0
    %1063 = vmatpush1.bf16.msra.mxu0 0
    %1064 = vmatprep.subr.bf16.mxu0 0
    %1065 = vmatpush1.bf16.msra.mxu0 0
    %1066 = vmatprep.subr.bf16.mxu0 0
    %1067 = vmatpush1.bf16.msra.mxu0 0
    %1068 = vmatprep.subr.bf16.mxu0 0
    %1069 = vmatpush1.bf16.msra.mxu0 0
    %1070 = vmatprep.subr.bf16.mxu0 0
    %1071 = vmatpush1.bf16.msra.mxu0 0
    %1072 = vmatprep.subr.bf16.mxu0 0
    %1073 = vmatpush1.bf16.msra.mxu0 0
    %1074 = vmatprep.subr.bf16.mxu0 0
    %1075 = vmatpush1.bf16.msra.mxu0 0
    %1076 = vmatprep.mubr.bf16.mxu0 0
    %1077 = vmatmul.mubr.bf16.gmra.mrb[0].mxu0 %v1042
    %v1078 = vpop.f32.mrb[0].mxu0
    %v1079 = vadd.f32 0.0, %v1078
    %v1080 = vpop.f32.mrb[0].mxu0
    %v1081 = vpop.f32.mrb[0].mxu0
    %v1082 = vadd.f32 0.0, %v1081
    %v1083 = vpop.f32.mrb[0].mxu0
    %1084 = vdwg.mxu0
    %s1085 = scalar_lea.vmem %s4, 8
    %v1086 = vld [vmem:[%s1085] sm:$0x1]
    %v1087 = vlaneseq
    %v1088 = vshrl.u32 %v1087, 7
    %v1089 = vsub.s32 0, %v1088
    %v1090 = vrot.slane %v1086, %v1089
    %v1091 = vadd.f32 %v1079, %v1090
    %v1092 = vadd.f32 %v1082, %v1090
    %v1093 = vpack.c.bf16 %v1092, %v1091
    %1095 = vrot.lane.b32.xlu0 %v1093, 96
    %v1096 = vpop.permute.xlu0 %1095
    %v1098 = vsel %vm153, %v1093, 0
    %v1101 = vsel %vm153, %v1096, 0
    %1103 = vmatprep.subr.bf16.mxu0 0
    %1104 = vmatpush1.bf16.xpose.msra.mxu0 %v1101
    %1105 = vmatprep.subr.bf16.mxu0 0
    %1106 = vmatpush1.bf16.xpose.msra.mxu0 0
    %1107 = vmatprep.subr.bf16.mxu0 0
    %1108 = vmatpush1.bf16.xpose.msra.mxu0 0
    %1109 = vmatprep.subr.bf16.mxu0 0
    %1110 = vmatpush1.bf16.xpose.msra.mxu0 0
    %1111 = vmatprep.subr.bf16.mxu0 0
    %1112 = vmatpush1.bf16.xpose.msra.mxu0 0
    %1113 = vmatprep.subr.bf16.mxu0 0
    %1114 = vmatpush1.bf16.xpose.msra.mxu0 0
    %1115 = vmatprep.subr.bf16.mxu0 0
    %1116 = vmatpush1.bf16.xpose.msra.mxu0 0
    %1117 = vmatprep.subr.bf16.mxu0 0
    %1118 = vmatpush1.bf16.xpose.msra.mxu0 0
    %1119 = vmatprep.subr.bf16.mxu0 0
    %1120 = vmatpush1.bf16.xpose.msra.mxu0 0
    %1121 = vmatprep.subr.bf16.mxu0 0
    %1122 = vmatpush1.bf16.xpose.msra.mxu0 0
    %1123 = vmatprep.subr.bf16.mxu0 0
    %1124 = vmatpush1.bf16.xpose.msra.mxu0 0
    %1125 = vmatprep.subr.bf16.mxu0 0
    %1126 = vmatpush1.bf16.xpose.msra.mxu0 0
    %1127 = vmatprep.subr.bf16.mxu0 0
    %1128 = vmatpush1.bf16.xpose.msra.mxu0 0
    %1129 = vmatprep.subr.bf16.mxu0 0
    %1130 = vmatpush1.bf16.xpose.msra.mxu0 0
    %1131 = vmatprep.subr.bf16.mxu0 0
    %1132 = vmatpush1.bf16.xpose.msra.mxu0 0
    %1133 = vmatprep.subr.bf16.mxu0 0
    %1134 = vmatpush1.bf16.xpose.msra.mxu0 0
    %1135 = vmatprep.mubr.bf16.mxu0 0
    %1136 = vmatmul.mubr.bf16.gmra.mrb[0].mxu0 %v1098
    %v1137 = vpop.f32.mrb[0].mxu0
    %v1138 = vadd.f32 0.0, %v1137
    %v1139 = vpop.f32.mrb[0].mxu0
    %v1140 = vpop.f32.mrb[0].mxu0
    %v1141 = vadd.f32 0.0, %v1140
    %v1142 = vpop.f32.mrb[0].mxu0
    %1143 = vdwg.mxu0
    %v1144 = vmul.f32 %v1138, 0.35355338
    %v1145 = vmul.f32 %v1141, 0.35355338
    %v1146 = vadd.f32 %v1144, %v35
    %v1147 = vadd.f32 %v1145, %v36
    %v1148 = vsel %vm205, %v1146, -inf
    %1149 = vmax.xlane.f32.xlu0 %v1148
    %v1150 = vpop.xlane.xlu0 %1149
    %v1151 = vsel %vm205, %v1147, -inf
    %1152 = vmax.xlane.f32.xlu0 %v1151
    %v1153 = vpop.xlane.xlu0 %1152
    %v1154 = vsub.f32 %v1146, %v1150
    %v1155 = vsub.f32 %v1147, %v1153
    %v1156 = vmul.f32 %v1154, 1.442695
    %v1157 = vpow.pop %v1156
    %v1158 = vmul.f32 %v1155, 1.442695
    %v1159 = vpow.pop %v1158
    %v1160 = vsel %vm205, %v1157, 0.0
    %1161 = vadd.xlane.f32.xlu0 %v1160
    %v1162 = vpop.xlane.xlu0 %1161
    %v1163 = vsel %vm205, %v1159, 0.0
    %1164 = vadd.xlane.f32.xlu0 %v1163
    %v1165 = vpop.xlane.xlu0 %1164
    %v1166 = vrcp.pop %v1162
    %v1167 = vrcp.pop %v1165
    %v1168 = vmul.f32 %v1157, %v1166
    %v1169 = vmul.f32 %v1159, %v1167
    %v1170 = vpack.c.bf16 %v1169, %v1168
    %1171 = vrot.lane.b32.xlu0 %v1093, 64
    %v1172 = vpop.permute.xlu0 %1171
    %v1175 = vsel %vm205, %v1170, 0
    %1177 = vmatprep.subr.bf16.mxu0 0
    %1178 = vmatpush1.bf16.msra.mxu0 %v1172
    %1179 = vmatprep.subr.bf16.mxu0 0
    %1180 = vmatpush1.bf16.msra.mxu0 0
    %1181 = vmatprep.subr.bf16.mxu0 0
    %1182 = vmatpush1.bf16.msra.mxu0 0
    %1183 = vmatprep.subr.bf16.mxu0 0
    %1184 = vmatpush1.bf16.msra.mxu0 0
    %1185 = vmatprep.subr.bf16.mxu0 0
    %1186 = vmatpush1.bf16.msra.mxu0 0
    %1187 = vmatprep.subr.bf16.mxu0 0
    %1188 = vmatpush1.bf16.msra.mxu0 0
    %1189 = vmatprep.subr.bf16.mxu0 0
    %1190 = vmatpush1.bf16.msra.mxu0 0
    %1191 = vmatprep.subr.bf16.mxu0 0
    %1192 = vmatpush1.bf16.msra.mxu0 0
    %1193 = vmatprep.subr.bf16.mxu0 0
    %1194 = vmatpush1.bf16.msra.mxu0 0
    %1195 = vmatprep.subr.bf16.mxu0 0
    %1196 = vmatpush1.bf16.msra.mxu0 0
    %1197 = vmatprep.subr.bf16.mxu0 0
    %1198 = vmatpush1.bf16.msra.mxu0 0
    %1199 = vmatprep.subr.bf16.mxu0 0
    %1200 = vmatpush1.bf16.msra.mxu0 0
    %1201 = vmatprep.subr.bf16.mxu0 0
    %1202 = vmatpush1.bf16.msra.mxu0 0
    %1203 = vmatprep.subr.bf16.mxu0 0
    %1204 = vmatpush1.bf16.msra.mxu0 0
    %1205 = vmatprep.subr.bf16.mxu0 0
    %1206 = vmatpush1.bf16.msra.mxu0 0
    %1207 = vmatprep.subr.bf16.mxu0 0
    %1208 = vmatpush1.bf16.msra.mxu0 0
    %1209 = vmatprep.mubr.bf16.mxu0 0
    %1210 = vmatmul.mubr.bf16.gmra.mrb[0].mxu0 %v1175
    %v1211 = vpop.f32.mrb[0].mxu0
    %v1212 = vadd.f32 0.0, %v1211
    %v1213 = vpop.f32.mrb[0].mxu0
    %v1214 = vpop.f32.mrb[0].mxu0
    %v1215 = vadd.f32 0.0, %v1214
    %v1216 = vpop.f32.mrb[0].mxu0
    %1217 = vdwg.mxu0
    %v1218 = vpack.c.bf16 %v1215, %v1212
    %1219 = vst.msk [vmem:[#allocation2] sm:$0xff] %vm153, %v1218
    %1220 = vrot.lane.b32.xlu0 %v1093, 120
    %v1221 = vpop.permute.xlu0 %1220
    %1222 = vrot.lane.b32.xlu0 %v1093, 88
    %v1223 = vpop.permute.xlu0 %1222
    %v1225 = vsel %vm153, %v1221, 0
    %v1228 = vsel %vm153, %v1223, 0
    %1230 = vmatprep.subr.bf16.mxu0 0
    %1231 = vmatpush1.bf16.xpose.msra.mxu0 %v1228
    %1232 = vmatprep.subr.bf16.mxu0 0
    %1233 = vmatpush1.bf16.xpose.msra.mxu0 0
    %1234 = vmatprep.subr.bf16.mxu0 0
    %1235 = vmatpush1.bf16.xpose.msra.mxu0 0
    %1236 = vmatprep.subr.bf16.mxu0 0
    %1237 = vmatpush1.bf16.xpose.msra.mxu0 0
    %1238 = vmatprep.subr.bf16.mxu0 0
    %1239 = vmatpush1.bf16.xpose.msra.mxu0 0
    %1240 = vmatprep.subr.bf16.mxu0 0
    %1241 = vmatpush1.bf16.xpose.msra.mxu0 0
    %1242 = vmatprep.subr.bf16.mxu0 0
    %1243 = vmatpush1.bf16.xpose.msra.mxu0 0
    %1244 = vmatprep.subr.bf16.mxu0 0
    %1245 = vmatpush1.bf16.xpose.msra.mxu0 0
    %1246 = vmatprep.subr.bf16.mxu0 0
    %1247 = vmatpush1.bf16.xpose.msra.mxu0 0
    %1248 = vmatprep.subr.bf16.mxu0 0
    %1249 = vmatpush1.bf16.xpose.msra.mxu0 0
    %1250 = vmatprep.subr.bf16.mxu0 0
    %1251 = vmatpush1.bf16.xpose.msra.mxu0 0
    %1252 = vmatprep.subr.bf16.mxu0 0
    %1253 = vmatpush1.bf16.xpose.msra.mxu0 0
    %1254 = vmatprep.subr.bf16.mxu0 0
    %1255 = vmatpush1.bf16.xpose.msra.mxu0 0
    %1256 = vmatprep.subr.bf16.mxu0 0
    %1257 = vmatpush1.bf16.xpose.msra.mxu0 0
    %1258 = vmatprep.subr.bf16.mxu0 0
    %1259 = vmatpush1.bf16.xpose.msra.mxu0 0
    %1260 = vmatprep.subr.bf16.mxu0 0
    %1261 = vmatpush1.bf16.xpose.msra.mxu0 0
    %1262 = vmatprep.mubr.bf16.mxu0 0
    %1263 = vmatmul.mubr.bf16.gmra.mrb[0].mxu0 %v1225
    %v1264 = vpop.f32.mrb[0].mxu0
    %v1265 = vadd.f32 0.0, %v1264
    %v1266 = vpop.f32.mrb[0].mxu0
    %v1267 = vpop.f32.mrb[0].mxu0
    %v1268 = vadd.f32 0.0, %v1267
    %v1269 = vpop.f32.mrb[0].mxu0
    %1270 = vdwg.mxu0
    %v1271 = vmul.f32 %v1265, 0.35355338
    %v1272 = vmul.f32 %v1268, 0.35355338
    %v1273 = vadd.f32 %v1271, %v35
    %v1274 = vadd.f32 %v1272, %v36
    %v1275 = vsel %vm205, %v1273, -inf
    %1276 = vmax.xlane.f32.xlu0 %v1275
    %v1277 = vpop.xlane.xlu0 %1276
    %v1278 = vsel %vm205, %v1274, -inf
    %1279 = vmax.xlane.f32.xlu0 %v1278
    %v1280 = vpop.xlane.xlu0 %1279
    %v1281 = vsub.f32 %v1273, %v1277
    %v1282 = vsub.f32 %v1274, %v1280
    %v1283 = vmul.f32 %v1281, 1.442695
    %v1284 = vpow.pop %v1283
    %v1285 = vmul.f32 %v1282, 1.442695
    %v1286 = vpow.pop %v1285
    %v1287 = vsel %vm205, %v1284, 0.0
    %1288 = vadd.xlane.f32.xlu0 %v1287
    %v1289 = vpop.xlane.xlu0 %1288
    %v1290 = vsel %vm205, %v1286, 0.0
    %1291 = vadd.xlane.f32.xlu0 %v1290
    %v1292 = vpop.xlane.xlu0 %1291
    %v1293 = vrcp.pop %v1289
    %v1294 = vrcp.pop %v1292
    %v1295 = vmul.f32 %v1284, %v1293
    %v1296 = vmul.f32 %v1286, %v1294
    %v1297 = vpack.c.bf16 %v1296, %v1295
    %1298 = vrot.lane.b32.xlu0 %v1093, 56
    %v1299 = vpop.permute.xlu0 %1298
    %v1302 = vsel %vm205, %v1297, 0
    %1304 = vmatprep.subr.bf16.mxu0 0
    %1305 = vmatpush1.bf16.msra.mxu0 %v1299
    %1306 = vmatprep.subr.bf16.mxu0 0
    %1307 = vmatpush1.bf16.msra.mxu0 0
    %1308 = vmatprep.subr.bf16.mxu0 0
    %1309 = vmatpush1.bf16.msra.mxu0 0
    %1310 = vmatprep.subr.bf16.mxu0 0
    %1311 = vmatpush1.bf16.msra.mxu0 0
    %1312 = vmatprep.subr.bf16.mxu0 0
    %1313 = vmatpush1.bf16.msra.mxu0 0
    %1314 = vmatprep.subr.bf16.mxu0 0
    %1315 = vmatpush1.bf16.msra.mxu0 0
    %1316 = vmatprep.subr.bf16.mxu0 0
    %1317 = vmatpush1.bf16.msra.mxu0 0
    %1318 = vmatprep.subr.bf16.mxu0 0
    %1319 = vmatpush1.bf16.msra.mxu0 0
    %1320 = vmatprep.subr.bf16.mxu0 0
    %1321 = vmatpush1.bf16.msra.mxu0 0
    %1322 = vmatprep.subr.bf16.mxu0 0
    %1323 = vmatpush1.bf16.msra.mxu0 0
    %1324 = vmatprep.subr.bf16.mxu0 0
    %1325 = vmatpush1.bf16.msra.mxu0 0
    %1326 = vmatprep.subr.bf16.mxu0 0
    %1327 = vmatpush1.bf16.msra.mxu0 0
    %1328 = vmatprep.subr.bf16.mxu0 0
    %1329 = vmatpush1.bf16.msra.mxu0 0
    %1330 = vmatprep.subr.bf16.mxu0 0
    %1331 = vmatpush1.bf16.msra.mxu0 0
    %1332 = vmatprep.subr.bf16.mxu0 0
    %1333 = vmatpush1.bf16.msra.mxu0 0
    %1334 = vmatprep.subr.bf16.mxu0 0
    %1335 = vmatpush1.bf16.msra.mxu0 0
    %1336 = vmatprep.mubr.bf16.mxu0 0
    %1337 = vmatmul.mubr.bf16.gmra.mrb[0].mxu0 %v1302
    %v1338 = vpop.f32.mrb[0].mxu0
    %v1339 = vadd.f32 0.0, %v1338
    %v1340 = vpop.f32.mrb[0].mxu0
    %v1341 = vpop.f32.mrb[0].mxu0
    %v1342 = vadd.f32 0.0, %v1341
    %v1343 = vpop.f32.mrb[0].mxu0
    %1344 = vdwg.mxu0
    %v1345 = vpack.c.bf16 %v1342, %v1339
    %1347 = vrot.lane.b32.xlu0 %v1345, 8
    %v1348 = vpop.permute.xlu0 %1347
    %1350 = vst.msk [vmem:[#allocation2] sm:$0xff] %vm408, %v1348
    %1351 = vrot.lane.b32.xlu0 %v1093, 112
    %v1352 = vpop.permute.xlu0 %1351
    %1353 = vrot.lane.b32.xlu0 %v1093, 80
    %v1354 = vpop.permute.xlu0 %1353
    %v1356 = vsel %vm153, %v1352, 0
    %v1359 = vsel %vm153, %v1354, 0
    %1361 = vmatprep.subr.bf16.mxu0 0
    %1362 = vmatpush1.bf16.xpose.msra.mxu0 %v1359
    %1363 = vmatprep.subr.bf16.mxu0 0
    %1364 = vmatpush1.bf16.xpose.msra.mxu0 0
    %1365 = vmatprep.subr.bf16.mxu0 0
    %1366 = vmatpush1.bf16.xpose.msra.mxu0 0
    %1367 = vmatprep.subr.bf16.mxu0 0
    %1368 = vmatpush1.bf16.xpose.msra.mxu0 0
    %1369 = vmatprep.subr.bf16.mxu0 0
    %1370 = vmatpush1.bf16.xpose.msra.mxu0 0
    %1371 = vmatprep.subr.bf16.mxu0 0
    %1372 = vmatpush1.bf16.xpose.msra.mxu0 0
    %1373 = vmatprep.subr.bf16.mxu0 0
    %1374 = vmatpush1.bf16.xpose.msra.mxu0 0
    %1375 = vmatprep.subr.bf16.mxu0 0
    %1376 = vmatpush1.bf16.xpose.msra.mxu0 0
    %1377 = vmatprep.subr.bf16.mxu0 0
    %1378 = vmatpush1.bf16.xpose.msra.mxu0 0
    %1379 = vmatprep.subr.bf16.mxu0 0
    %1380 = vmatpush1.bf16.xpose.msra.mxu0 0
    %1381 = vmatprep.subr.bf16.mxu0 0
    %1382 = vmatpush1.bf16.xpose.msra.mxu0 0
    %1383 = vmatprep.subr.bf16.mxu0 0
    %1384 = vmatpush1.bf16.xpose.msra.mxu0 0
    %1385 = vmatprep.subr.bf16.mxu0 0
    %1386 = vmatpush1.bf16.xpose.msra.mxu0 0
    %1387 = vmatprep.subr.bf16.mxu0 0
    %1388 = vmatpush1.bf16.xpose.msra.mxu0 0
    %1389 = vmatprep.subr.bf16.mxu0 0
    %1390 = vmatpush1.bf16.xpose.msra.mxu0 0
    %1391 = vmatprep.subr.bf16.mxu0 0
    %1392 = vmatpush1.bf16.xpose.msra.mxu0 0
    %1393 = vmatprep.mubr.bf16.mxu0 0
    %1394 = vmatmul.mubr.bf16.gmra.mrb[0].mxu0 %v1356
    %v1395 = vpop.f32.mrb[0].mxu0
    %v1396 = vadd.f32 0.0, %v1395
    %v1397 = vpop.f32.mrb[0].mxu0
    %v1398 = vpop.f32.mrb[0].mxu0
    %v1399 = vadd.f32 0.0, %v1398
    %v1400 = vpop.f32.mrb[0].mxu0
    %1401 = vdwg.mxu0
    %v1402 = vmul.f32 %v1396, 0.35355338
    %v1403 = vmul.f32 %v1399, 0.35355338
    %v1404 = vadd.f32 %v1402, %v35
    %v1405 = vadd.f32 %v1403, %v36
    %v1406 = vsel %vm205, %v1404, -inf
    %1407 = vmax.xlane.f32.xlu0 %v1406
    %v1408 = vpop.xlane.xlu0 %1407
    %v1409 = vsel %vm205, %v1405, -inf
    %1410 = vmax.xlane.f32.xlu0 %v1409
    %v1411 = vpop.xlane.xlu0 %1410
    %v1412 = vsub.f32 %v1404, %v1408
    %v1413 = vsub.f32 %v1405, %v1411
    %v1414 = vmul.f32 %v1412, 1.442695
    %v1415 = vpow.pop %v1414
    %v1416 = vmul.f32 %v1413, 1.442695
    %v1417 = vpow.pop %v1416
    %v1418 = vsel %vm205, %v1415, 0.0
    %1419 = vadd.xlane.f32.xlu0 %v1418
    %v1420 = vpop.xlane.xlu0 %1419
    %v1421 = vsel %vm205, %v1417, 0.0
    %1422 = vadd.xlane.f32.xlu0 %v1421
    %v1423 = vpop.xlane.xlu0 %1422
    %v1424 = vrcp.pop %v1420
    %v1425 = vrcp.pop %v1423
    %v1426 = vmul.f32 %v1415, %v1424
    %v1427 = vmul.f32 %v1417, %v1425
    %v1428 = vpack.c.bf16 %v1427, %v1426
    %1429 = vrot.lane.b32.xlu0 %v1093, 48
    %v1430 = vpop.permute.xlu0 %1429
    %v1433 = vsel %vm205, %v1428, 0
    %1435 = vmatprep.subr.bf16.mxu0 0
    %1436 = vmatpush1.bf16.msra.mxu0 %v1430
    %1437 = vmatprep.subr.bf16.mxu0 0
    %1438 = vmatpush1.bf16.msra.mxu0 0
    %1439 = vmatprep.subr.bf16.mxu0 0
    %1440 = vmatpush1.bf16.msra.mxu0 0
    %1441 = vmatprep.subr.bf16.mxu0 0
    %1442 = vmatpush1.bf16.msra.mxu0 0
    %1443 = vmatprep.subr.bf16.mxu0 0
    %1444 = vmatpush1.bf16.msra.mxu0 0
    %1445 = vmatprep.subr.bf16.mxu0 0
    %1446 = vmatpush1.bf16.msra.mxu0 0
    %1447 = vmatprep.subr.bf16.mxu0 0
    %1448 = vmatpush1.bf16.msra.mxu0 0
    %1449 = vmatprep.subr.bf16.mxu0 0
    %1450 = vmatpush1.bf16.msra.mxu0 0
    %1451 = vmatprep.subr.bf16.mxu0 0
    %1452 = vmatpush1.bf16.msra.mxu0 0
    %1453 = vmatprep.subr.bf16.mxu0 0
    %1454 = vmatpush1.bf16.msra.mxu0 0
    %1455 = vmatprep.subr.bf16.mxu0 0
    %1456 = vmatpush1.bf16.msra.mxu0 0
    %1457 = vmatprep.subr.bf16.mxu0 0
    %1458 = vmatpush1.bf16.msra.mxu0 0
    %1459 = vmatprep.subr.bf16.mxu0 0
    %1460 = vmatpush1.bf16.msra.mxu0 0
    %1461 = vmatprep.subr.bf16.mxu0 0
    %1462 = vmatpush1.bf16.msra.mxu0 0
    %1463 = vmatprep.subr.bf16.mxu0 0
    %1464 = vmatpush1.bf16.msra.mxu0 0
    %1465 = vmatprep.subr.bf16.mxu0 0
    %1466 = vmatpush1.bf16.msra.mxu0 0
    %1467 = vmatprep.mubr.bf16.mxu0 0
    %1468 = vmatmul.mubr.bf16.gmra.mrb[0].mxu0 %v1433
    %v1469 = vpop.f32.mrb[0].mxu0
    %v1470 = vadd.f32 0.0, %v1469
    %v1471 = vpop.f32.mrb[0].mxu0
    %v1472 = vpop.f32.mrb[0].mxu0
    %v1473 = vadd.f32 0.0, %v1472
    %v1474 = vpop.f32.mrb[0].mxu0
    %1475 = vdwg.mxu0
    %v1476 = vpack.c.bf16 %v1473, %v1470
    %1478 = vrot.lane.b32.xlu0 %v1476, 16
    %v1479 = vpop.permute.xlu0 %1478
    %1481 = vst.msk [vmem:[#allocation2] sm:$0xff] %vm540, %v1479
    %1482 = vrot.lane.b32.xlu0 %v1093, 104
    %v1483 = vpop.permute.xlu0 %1482
    %1484 = vrot.lane.b32.xlu0 %v1093, 72
    %v1485 = vpop.permute.xlu0 %1484
    %v1487 = vsel %vm153, %v1483, 0
    %v1490 = vsel %vm153, %v1485, 0
    %1492 = vmatprep.subr.bf16.mxu0 0
    %1493 = vmatpush1.bf16.xpose.msra.mxu0 %v1490
    %1494 = vmatprep.subr.bf16.mxu0 0
    %1495 = vmatpush1.bf16.xpose.msra.mxu0 0
    %1496 = vmatprep.subr.bf16.mxu0 0
    %1497 = vmatpush1.bf16.xpose.msra.mxu0 0
    %1498 = vmatprep.subr.bf16.mxu0 0
    %1499 = vmatpush1.bf16.xpose.msra.mxu0 0
    %1500 = vmatprep.subr.bf16.mxu0 0
    %1501 = vmatpush1.bf16.xpose.msra.mxu0 0
    %1502 = vmatprep.subr.bf16.mxu0 0
    %1503 = vmatpush1.bf16.xpose.msra.mxu0 0
    %1504 = vmatprep.subr.bf16.mxu0 0
    %1505 = vmatpush1.bf16.xpose.msra.mxu0 0
    %1506 = vmatprep.subr.bf16.mxu0 0
    %1507 = vmatpush1.bf16.xpose.msra.mxu0 0
    %1508 = vmatprep.subr.bf16.mxu0 0
    %1509 = vmatpush1.bf16.xpose.msra.mxu0 0
    %1510 = vmatprep.subr.bf16.mxu0 0
    %1511 = vmatpush1.bf16.xpose.msra.mxu0 0
    %1512 = vmatprep.subr.bf16.mxu0 0
    %1513 = vmatpush1.bf16.xpose.msra.mxu0 0
    %1514 = vmatprep.subr.bf16.mxu0 0
    %1515 = vmatpush1.bf16.xpose.msra.mxu0 0
    %1516 = vmatprep.subr.bf16.mxu0 0
    %1517 = vmatpush1.bf16.xpose.msra.mxu0 0
    %1518 = vmatprep.subr.bf16.mxu0 0
    %1519 = vmatpush1.bf16.xpose.msra.mxu0 0
    %1520 = vmatprep.subr.bf16.mxu0 0
    %1521 = vmatpush1.bf16.xpose.msra.mxu0 0
    %1522 = vmatprep.subr.bf16.mxu0 0
    %1523 = vmatpush1.bf16.xpose.msra.mxu0 0
    %1524 = vmatprep.mubr.bf16.mxu0 0
    %1525 = vmatmul.mubr.bf16.gmra.mrb[0].mxu0 %v1487
    %v1526 = vpop.f32.mrb[0].mxu0
    %v1527 = vadd.f32 0.0, %v1526
    %v1528 = vpop.f32.mrb[0].mxu0
    %v1529 = vpop.f32.mrb[0].mxu0
    %v1530 = vadd.f32 0.0, %v1529
    %v1531 = vpop.f32.mrb[0].mxu0
    %1532 = vdwg.mxu0
    %v1533 = vmul.f32 %v1527, 0.35355338
    %v1534 = vmul.f32 %v1530, 0.35355338
    %v1535 = vadd.f32 %v1533, %v35
    %v1536 = vadd.f32 %v1534, %v36
    %v1537 = vsel %vm205, %v1535, -inf
    %1538 = vmax.xlane.f32.xlu0 %v1537
    %v1539 = vpop.xlane.xlu0 %1538
    %v1540 = vsel %vm205, %v1536, -inf
    %1541 = vmax.xlane.f32.xlu0 %v1540
    %v1542 = vpop.xlane.xlu0 %1541
    %v1543 = vsub.f32 %v1535, %v1539
    %v1544 = vsub.f32 %v1536, %v1542
    %v1545 = vmul.f32 %v1543, 1.442695
    %v1546 = vpow.pop %v1545
    %v1547 = vmul.f32 %v1544, 1.442695
    %v1548 = vpow.pop %v1547
    %v1549 = vsel %vm205, %v1546, 0.0
    %1550 = vadd.xlane.f32.xlu0 %v1549
    %v1551 = vpop.xlane.xlu0 %1550
    %v1552 = vsel %vm205, %v1548, 0.0
    %1553 = vadd.xlane.f32.xlu0 %v1552
    %v1554 = vpop.xlane.xlu0 %1553
    %v1555 = vrcp.pop %v1551
    %v1556 = vrcp.pop %v1554
    %v1557 = vmul.f32 %v1546, %v1555
    %v1558 = vmul.f32 %v1548, %v1556
    %v1559 = vpack.c.bf16 %v1558, %v1557
    %1560 = vrot.lane.b32.xlu0 %v1093, 40
    %v1561 = vpop.permute.xlu0 %1560
    %v1564 = vsel %vm205, %v1559, 0
    %1566 = vmatprep.subr.bf16.mxu0 0
    %1567 = vmatpush1.bf16.msra.mxu0 %v1561
    %1568 = vmatprep.subr.bf16.mxu0 0
    %1569 = vmatpush1.bf16.msra.mxu0 0
    %1570 = vmatprep.subr.bf16.mxu0 0
    %1571 = vmatpush1.bf16.msra.mxu0 0
    %1572 = vmatprep.subr.bf16.mxu0 0
    %1573 = vmatpush1.bf16.msra.mxu0 0
    %1574 = vmatprep.subr.bf16.mxu0 0
    %1575 = vmatpush1.bf16.msra.mxu0 0
    %1576 = vmatprep.subr.bf16.mxu0 0
    %1577 = vmatpush1.bf16.msra.mxu0 0
    %1578 = vmatprep.subr.bf16.mxu0 0
    %1579 = vmatpush1.bf16.msra.mxu0 0
    %1580 = vmatprep.subr.bf16.mxu0 0
    %1581 = vmatpush1.bf16.msra.mxu0 0
    %1582 = vmatprep.subr.bf16.mxu0 0
    %1583 = vmatpush1.bf16.msra.mxu0 0
    %1584 = vmatprep.subr.bf16.mxu0 0
    %1585 = vmatpush1.bf16.msra.mxu0 0
    %1586 = vmatprep.subr.bf16.mxu0 0
    %1587 = vmatpush1.bf16.msra.mxu0 0
    %1588 = vmatprep.subr.bf16.mxu0 0
    %1589 = vmatpush1.bf16.msra.mxu0 0
    %1590 = vmatprep.subr.bf16.mxu0 0
    %1591 = vmatpush1.bf16.msra.mxu0 0
    %1592 = vmatprep.subr.bf16.mxu0 0
    %1593 = vmatpush1.bf16.msra.mxu0 0
    %1594 = vmatprep.subr.bf16.mxu0 0
    %1595 = vmatpush1.bf16.msra.mxu0 0
    %1596 = vmatprep.subr.bf16.mxu0 0
    %1597 = vmatpush1.bf16.msra.mxu0 0
    %1598 = vmatprep.mubr.bf16.mxu0 0
    %1599 = vmatmul.mubr.bf16.gmra.mrb[0].mxu0 %v1564
    %v1600 = vpop.f32.mrb[0].mxu0
    %v1601 = vadd.f32 0.0, %v1600
    %v1602 = vpop.f32.mrb[0].mxu0
    %v1603 = vpop.f32.mrb[0].mxu0
    %v1604 = vadd.f32 0.0, %v1603
    %v1605 = vpop.f32.mrb[0].mxu0
    %1606 = vdwg.mxu0
    %v1607 = vpack.c.bf16 %v1604, %v1601
    %1609 = vrot.lane.b32.xlu0 %v1607, 24
    %v1610 = vpop.permute.xlu0 %1609
    %1612 = vst.msk [vmem:[#allocation2] sm:$0xff] %vm672, %v1610
    %v1613 = vld [vmem:[%s1023] sm:$0xf]
    %v1614 = vld [vmem:[%s1023 + $0x4] sm:$0xf]
    %v1615 = vld [vmem:[%s1023 + $0x8] sm:$0xf]
    %v1616 = vld [vmem:[%s1023 + $0xc] sm:$0xf]
    %v1617 = vld [vmem:[#allocation2] sm:$0xff]
    %v1618 = vld [vmem:[%s1085 + $0x1] sm:$0x1]
    %v1619 = vlaneseq
    %v1620 = vshrl.u32 %v1619, 7
    %v1621 = vsub.s32 0, %v1620
    %v1622 = vrot.slane %v1618, %v1621
    %v1627 = vunpack.c.l.b16 %v1613
    %v1628 = vunpack.c.l.b16 %v1614
    %v1629 = vunpack.c.l.b16 %v1615
    %v1630 = vunpack.c.l.b16 %v1616
    %v1631 = vpack.c.b16 %v1628, %v1627
    %v1632 = vpack.c.b16 %v1630, %v1629
    %1633 = vrot.lane.b32.xlu0 %v1631, 32
    %v1634 = vpop.permute.xlu0 %1633
    %1635 = vrot.lane.b32.xlu0 %v1632, 32
    %v1636 = vpop.permute.xlu0 %1635
    %v1640 = vsel %vm41, %v1617, 0
    %1642 = vmatprep.subr.bf16.mxu0 0
    %1643 = vmatpush1.bf16.msra.mxu0 %v1634
    %1644 = vmatprep.subr.bf16.mxu0 0
    %1645 = vmatpush1.bf16.msra.mxu0 %v1636
    %1646 = vmatprep.subr.bf16.mxu0 0
    %1647 = vmatpush1.bf16.msra.mxu0 0
    %1648 = vmatprep.subr.bf16.mxu0 0
    %1649 = vmatpush1.bf16.msra.mxu0 0
    %1650 = vmatprep.subr.bf16.mxu0 0
    %1651 = vmatpush1.bf16.msra.mxu0 0
    %1652 = vmatprep.subr.bf16.mxu0 0
    %1653 = vmatpush1.bf16.msra.mxu0 0
    %1654 = vmatprep.subr.bf16.mxu0 0
    %1655 = vmatpush1.bf16.msra.mxu0 0
    %1656 = vmatprep.subr.bf16.mxu0 0
    %1657 = vmatpush1.bf16.msra.mxu0 0
    %1658 = vmatprep.subr.bf16.mxu0 0
    %1659 = vmatpush1.bf16.msra.mxu0 0
    %1660 = vmatprep.subr.bf16.mxu0 0
    %1661 = vmatpush1.bf16.msra.mxu0 0
    %1662 = vmatprep.subr.bf16.mxu0 0
    %1663 = vmatpush1.bf16.msra.mxu0 0
    %1664 = vmatprep.subr.bf16.mxu0 0
    %1665 = vmatpush1.bf16.msra.mxu0 0
    %1666 = vmatprep.subr.bf16.mxu0 0
    %1667 = vmatpush1.bf16.msra.mxu0 0
    %1668 = vmatprep.subr.bf16.mxu0 0
    %1669 = vmatpush1.bf16.msra.mxu0 0
    %1670 = vmatprep.subr.bf16.mxu0 0
    %1671 = vmatpush1.bf16.msra.mxu0 0
    %1672 = vmatprep.subr.bf16.mxu0 0
    %1673 = vmatpush1.bf16.msra.mxu0 0
    %1674 = vmatprep.mubr.bf16.mxu0 0
    %1675 = vmatmul.mubr.bf16.gmra.mrb[0].mxu0 %v1640
    %v1676 = vpop.f32.mrb[0].mxu0
    %v1677 = vadd.f32 %v1622, %v1676
    %v1678 = vpop.f32.mrb[0].mxu0
    %v1679 = vpop.f32.mrb[0].mxu0
    %v1680 = vadd.f32 %v1622, %v1679
    %v1681 = vpop.f32.mrb[0].mxu0
    %1682 = vdwg.mxu0
    %v1683 = vadd.f32 %v1021, %v1677
    %v1684 = vadd.f32 %v1022, %v1680
    %v1685 = vld [vmem:[%s1085 + $0x2] sm:$0x1]
    %v1686 = vld [vmem:[%s1085 + $0x3] sm:$0x1]
    %v1687 = vsel %vm41, %v1683, 0.0
    %1688 = vadd.xlane.f32.xlu0 %v1687
    %v1689 = vpop.xlane.xlu0 %1688
    %v1690 = vsel %vm41, %v1684, 0.0
    %1691 = vadd.xlane.f32.xlu0 %v1690
    %v1692 = vpop.xlane.xlu0 %1691
    %v1693 = vmul.f32 %v1689, %v48
    %v1694 = vmul.f32 %v1692, %v48
    %v1695 = vsub.f32 %v1683, %v1693
    %v1696 = vsub.f32 %v1684, %v1694
    %v1697 = vmul.f32 %v1695, %v1695
    %v1698 = vmul.f32 %v1696, %v1696
    %v1699 = vsel %vm41, %v1697, 0.0
    %1700 = vadd.xlane.f32.xlu0 %v1699
    %v1701 = vpop.xlane.xlu0 %1700
    %v1702 = vsel %vm41, %v1698, 0.0
    %1703 = vadd.xlane.f32.xlu0 %v1702
    %v1704 = vpop.xlane.xlu0 %1703
    %v1705 = vmul.f32 %v1701, %v48
    %v1706 = vmul.f32 %v1704, %v48
    %v1707 = vadd.f32 %v1705, 1e-12
    %v1708 = vadd.f32 %v1706, 1e-12
    %v1709 = vrsqrt.pop %v1707
    %v1710 = vrsqrt.pop %v1708
    %v1711 = vmul.f32 %v1695, %v1709
    %v1712 = vmul.f32 %v1696, %v1710
    %v1713 = vlaneseq
    %v1714 = vshrl.u32 %v1713, 7
    %v1715 = vsub.s32 0, %v1714
    %v1716 = vrot.slane %v1685, %v1715
    %v1717 = vmul.f32 %v1711, %v1716
    %v1718 = vmul.f32 %v1712, %v1716
    %v1719 = vlaneseq
    %v1720 = vshrl.u32 %v1719, 7
    %v1721 = vsub.s32 0, %v1720
    %v1722 = vrot.slane %v1686, %v1721
    %v1723 = vadd.f32 %v1717, %v1722
    %v1724 = vadd.f32 %v1718, %v1722
    %v1725 = vld [vmem:[%s1023 + $0x10] sm:$0xf]
    %v1726 = vld [vmem:[%s1023 + $0x14] sm:$0xf]
    %v1727 = vld [vmem:[%s1023 + $0x18] sm:$0xf]
    %v1728 = vld [vmem:[%s1023 + $0x1c] sm:$0xf]
    %v1729 = vpack.c.bf16 %v1724, %v1723
    %v1730 = vld [vmem:[%s1085 + $0x4] sm:$0x1]
    %v1731 = vlaneseq
    %v1732 = vshrl.u32 %v1731, 7
    %v1733 = vsub.s32 0, %v1732
    %v1734 = vrot.slane %v1730, %v1733
    %v1739 = vunpack.c.l.b16 %v1725
    %v1740 = vunpack.c.l.b16 %v1726
    %v1741 = vunpack.c.l.b16 %v1727
    %v1742 = vunpack.c.l.b16 %v1728
    %v1743 = vpack.c.b16 %v1740, %v1739
    %v1744 = vpack.c.b16 %v1742, %v1741
    %v1748 = vsel %vm41, %v1729, 0
    %1750 = vmatprep.subr.bf16.mxu0 0
    %1751 = vmatpush1.bf16.msra.mxu0 %v1743
    %1752 = vmatprep.subr.bf16.mxu0 0
    %1753 = vmatpush1.bf16.msra.mxu0 %v1744
    %1754 = vmatprep.subr.bf16.mxu0 0
    %1755 = vmatpush1.bf16.msra.mxu0 0
    %1756 = vmatprep.subr.bf16.mxu0 0
    %1757 = vmatpush1.bf16.msra.mxu0 0
    %1758 = vmatprep.subr.bf16.mxu0 0
    %1759 = vmatpush1.bf16.msra.mxu0 0
    %1760 = vmatprep.subr.bf16.mxu0 0
    %1761 = vmatpush1.bf16.msra.mxu0 0
    %1762 = vmatprep.subr.bf16.mxu0 0
    %1763 = vmatpush1.bf16.msra.mxu0 0
    %1764 = vmatprep.subr.bf16.mxu0 0
    %1765 = vmatpush1.bf16.msra.mxu0 0
    %1766 = vmatprep.subr.bf16.mxu0 0
    %1767 = vmatpush1.bf16.msra.mxu0 0
    %1768 = vmatprep.subr.bf16.mxu0 0
    %1769 = vmatpush1.bf16.msra.mxu0 0
    %1770 = vmatprep.subr.bf16.mxu0 0
    %1771 = vmatpush1.bf16.msra.mxu0 0
    %1772 = vmatprep.subr.bf16.mxu0 0
    %1773 = vmatpush1.bf16.msra.mxu0 0
    %1774 = vmatprep.subr.bf16.mxu0 0
    %1775 = vmatpush1.bf16.msra.mxu0 0
    %1776 = vmatprep.subr.bf16.mxu0 0
    %1777 = vmatpush1.bf16.msra.mxu0 0
    %1778 = vmatprep.subr.bf16.mxu0 0
    %1779 = vmatpush1.bf16.msra.mxu0 0
    %1780 = vmatprep.subr.bf16.mxu0 0
    %1781 = vmatpush1.bf16.msra.mxu0 0
    %1782 = vmatprep.mubr.bf16.mxu0 0
    %1783 = vmatmul.mubr.bf16.gmra.mrb[0].mxu0 %v1748
    %v1784 = vpop.f32.mrb[0].mxu0
    %v1785 = vadd.f32 %v1734, %v1784
    %v1786 = vpop.f32.mrb[0].mxu0
    %v1787 = vpop.f32.mrb[0].mxu0
    %v1788 = vadd.f32 %v1734, %v1787
    %v1789 = vpop.f32.mrb[0].mxu0
    %1790 = vdwg.mxu0
    %v1791 = vmul.f32 %v1785, 0.5
    %v1792 = vmul.f32 %v1788, 0.5
    %v1793 = vmul.f32 %v1785, 0.044715
    %v1794 = vmul.f32 %v1788, 0.044715
    %v1795 = vmul.f32 %v1793, %v1785
    %v1796 = vmul.f32 %v1794, %v1788
    %v1797 = vmul.f32 %v1795, %v1785
    %v1798 = vmul.f32 %v1796, %v1788
    %v1799 = vadd.f32 %v1785, %v1797
    %v1800 = vadd.f32 %v1788, %v1798
    %v1801 = vmul.f32 %v1799, 0.7978846
    %v1802 = vmul.f32 %v1800, 0.7978846
    %v1803 = vtanh.pop %v1801
    %v1804 = vtanh.pop %v1802
    %v1805 = vadd.f32 %v1803, 1.0
    %v1806 = vadd.f32 %v1804, 1.0
    %v1807 = vmul.f32 %v1791, %v1805
    %v1808 = vmul.f32 %v1792, %v1806
    %v1809 = vpack.c.bf16 %v1808, %v1807
    %s1810 = scalar_lea.vmem %s3, 64
    %v1811 = vld [vmem:[%s1810] sm:$0xf]
    %v1812 = vld [vmem:[%s1810 + $0x4] sm:$0xf]
    %v1813 = vld [vmem:[%s1810 + $0x8] sm:$0xf]
    %v1814 = vld [vmem:[%s1810 + $0xc] sm:$0xf]
    %v1815 = vld [vmem:[%s1810 + $0x10] sm:$0xf]
    %v1816 = vld [vmem:[%s1810 + $0x14] sm:$0xf]
    %v1817 = vld [vmem:[%s1810 + $0x18] sm:$0xf]
    %v1818 = vld [vmem:[%s1810 + $0x1c] sm:$0xf]
    %v1819 = vld [vmem:[%s1810 + $0x20] sm:$0xf]
    %v1820 = vld [vmem:[%s1810 + $0x24] sm:$0xf]
    %v1821 = vld [vmem:[%s1810 + $0x28] sm:$0xf]
    %v1822 = vld [vmem:[%s1810 + $0x2c] sm:$0xf]
    %v1823 = vld [vmem:[%s1810 + $0x30] sm:$0xf]
    %v1824 = vld [vmem:[%s1810 + $0x34] sm:$0xf]
    %v1825 = vld [vmem:[%s1810 + $0x38] sm:$0xf]
    %v1826 = vld [vmem:[%s1810 + $0x3c] sm:$0xf]
    %v1827 = vld [vmem:[%s1085 + $0x5] sm:$0x1]
    %v1828 = vlaneseq
    %v1829 = vshrl.u32 %v1828, 7
    %v1830 = vsub.s32 0, %v1829
    %v1831 = vrot.slane %v1827, %v1830
    %v1848 = vunpack.c.l.b16 %v1811
    %v1849 = vunpack.c.l.b16 %v1812
    %v1850 = vunpack.c.l.b16 %v1813
    %v1851 = vunpack.c.l.b16 %v1814
    %v1852 = vunpack.c.l.b16 %v1815
    %v1853 = vunpack.c.l.b16 %v1816
    %v1854 = vunpack.c.l.b16 %v1817
    %v1855 = vunpack.c.l.b16 %v1818
    %v1856 = vunpack.c.l.b16 %v1819
    %v1857 = vunpack.c.l.b16 %v1820
    %v1858 = vunpack.c.l.b16 %v1821
    %v1859 = vunpack.c.l.b16 %v1822
    %v1860 = vunpack.c.l.b16 %v1823
    %v1861 = vunpack.c.l.b16 %v1824
    %v1862 = vunpack.c.l.b16 %v1825
    %v1863 = vunpack.c.l.b16 %v1826
    %v1864 = vpack.c.b16 %v1849, %v1848
    %v1865 = vpack.c.b16 %v1851, %v1850
    %v1866 = vpack.c.b16 %v1853, %v1852
    %v1867 = vpack.c.b16 %v1855, %v1854
    %v1868 = vpack.c.b16 %v1857, %v1856
    %v1869 = vpack.c.b16 %v1859, %v1858
    %v1870 = vpack.c.b16 %v1861, %v1860
    %v1871 = vpack.c.b16 %v1863, %v1862
    %1880 = vmatprep.subr.bf16.mxu0 0
    %1881 = vmatpush1.bf16.msra.mxu0 %v1864
    %1882 = vmatprep.subr.bf16.mxu0 0
    %1883 = vmatpush1.bf16.msra.mxu0 %v1865
    %1884 = vmatprep.subr.bf16.mxu0 0
    %1885 = vmatpush1.bf16.msra.mxu0 %v1866
    %1886 = vmatprep.subr.bf16.mxu0 0
    %1887 = vmatpush1.bf16.msra.mxu0 %v1867
    %1888 = vmatprep.subr.bf16.mxu0 0
    %1889 = vmatpush1.bf16.msra.mxu0 %v1868
    %1890 = vmatprep.subr.bf16.mxu0 0
    %1891 = vmatpush1.bf16.msra.mxu0 %v1869
    %1892 = vmatprep.subr.bf16.mxu0 0
    %1893 = vmatpush1.bf16.msra.mxu0 %v1870
    %1894 = vmatprep.subr.bf16.mxu0 0
    %1895 = vmatpush1.bf16.msra.mxu0 %v1871
    %1896 = vmatprep.subr.bf16.mxu0 0
    %1897 = vmatpush1.bf16.msra.mxu0 0
    %1898 = vmatprep.subr.bf16.mxu0 0
    %1899 = vmatpush1.bf16.msra.mxu0 0
    %1900 = vmatprep.subr.bf16.mxu0 0
    %1901 = vmatpush1.bf16.msra.mxu0 0
    %1902 = vmatprep.subr.bf16.mxu0 0
    %1903 = vmatpush1.bf16.msra.mxu0 0
    %1904 = vmatprep.subr.bf16.mxu0 0
    %1905 = vmatpush1.bf16.msra.mxu0 0
    %1906 = vmatprep.subr.bf16.mxu0 0
    %1907 = vmatpush1.bf16.msra.mxu0 0
    %1908 = vmatprep.subr.bf16.mxu0 0
    %1909 = vmatpush1.bf16.msra.mxu0 0
    %1910 = vmatprep.subr.bf16.mxu0 0
    %1911 = vmatpush1.bf16.msra.mxu0 0
    %1912 = vmatprep.mubr.bf16.mxu0 0
    %1913 = vmatmul.mubr.bf16.gmra.mrb[0].mxu0 %v1809
    %v1914 = vpop.f32.mrb[0].mxu0
    %v1915 = vadd.f32 %v1831, %v1914
    %v1916 = vpop.f32.mrb[0].mxu0
    %v1917 = vpop.f32.mrb[0].mxu0
    %v1918 = vadd.f32 %v1831, %v1917
    %v1919 = vpop.f32.mrb[0].mxu0
    %1920 = vdwg.mxu0
    %v1921 = vadd.f32 %v1723, %v1915
    %v1922 = vadd.f32 %v1724, %v1918
    %v1923 = vld [vmem:[%s1085 + $0x6] sm:$0x1]
    %v1924 = vld [vmem:[%s1085 + $0x7] sm:$0x1]
    %v1925 = vsel %vm41, %v1921, 0.0
    %1926 = vadd.xlane.f32.xlu0 %v1925
    %v1927 = vpop.xlane.xlu0 %1926
    %v1928 = vsel %vm41, %v1922, 0.0
    %1929 = vadd.xlane.f32.xlu0 %v1928
    %v1930 = vpop.xlane.xlu0 %1929
    %v1931 = vmul.f32 %v1927, %v48
    %v1932 = vmul.f32 %v1930, %v48
    %v1933 = vsub.f32 %v1921, %v1931
    %v1934 = vsub.f32 %v1922, %v1932
    %v1935 = vmul.f32 %v1933, %v1933
    %v1936 = vmul.f32 %v1934, %v1934
    %v1937 = vsel %vm41, %v1935, 0.0
    %1938 = vadd.xlane.f32.xlu0 %v1937
    %v1939 = vpop.xlane.xlu0 %1938
    %v1940 = vsel %vm41, %v1936, 0.0
    %1941 = vadd.xlane.f32.xlu0 %v1940
    %v1942 = vpop.xlane.xlu0 %1941
    %v1943 = vmul.f32 %v1939, %v48
    %v1944 = vmul.f32 %v1942, %v48
    %v1945 = vadd.f32 %v1943, 1e-12
    %v1946 = vadd.f32 %v1944, 1e-12
    %v1947 = vrsqrt.pop %v1945
    %v1948 = vrsqrt.pop %v1946
    %v1949 = vmul.f32 %v1933, %v1947
    %v1950 = vmul.f32 %v1934, %v1948
    %v1951 = vlaneseq
    %v1952 = vshrl.u32 %v1951, 7
    %v1953 = vsub.s32 0, %v1952
    %v1954 = vrot.slane %v1923, %v1953
    %v1955 = vmul.f32 %v1949, %v1954
    %v1956 = vmul.f32 %v1950, %v1954
    %v1957 = vlaneseq
    %v1958 = vshrl.u32 %v1957, 7
    %v1959 = vsub.s32 0, %v1958
    %v1960 = vrot.slane %v1924, %v1959
    %v1961 = vadd.f32 %v1955, %v1960
    %v1962 = vadd.f32 %v1956, %v1960
    %1963 = vst.msk [vmem:[#allocation3] sm:$0xff] %vm41, %v1961
    %1964 = vst.msk [vmem:[#allocation3 + $0x8] sm:$0xff] %vm41, %v1962
    %v1966 = vrot.slane %v1962, 7
    %vm1968 = vcmask 1040384
    %v1969 = vsel %vm1968, %v1961, %v1966
    %v1970 = vpack.c.bf16 %v1969, %v1969
    %v1971 = vld [vmem:[%s5] sm:$0xf]
    %v1972 = vld [vmem:[%s5 + $0x4] sm:$0xf]
    %v1973 = vld [vmem:[%s5 + $0x8] sm:$0xf]
    %v1974 = vld [vmem:[%s5 + $0xc] sm:$0xf]
    %v1975 = vld [vmem:[%s7 + $0x2] sm:$0x1]
    %v1976 = vlaneseq
    %v1977 = vshrl.u32 %v1976, 7
    %v1978 = vsub.s32 0, %v1977
    %v1979 = vrot.slane %v1975, %v1978
    %v1984 = vunpack.c.l.b16 %v1971
    %v1985 = vunpack.c.l.b16 %v1972
    %v1986 = vunpack.c.l.b16 %v1973
    %v1987 = vunpack.c.l.b16 %v1974
    %v1988 = vpack.c.b16 %v1985, %v1984
    %v1989 = vpack.c.b16 %v1987, %v1986
    %v1993 = vsel %vm41, %v1970, 0
    %1995 = vmatprep.subr.bf16.mxu0 0
    %1996 = vmatpush1.bf16.msra.mxu0 %v1988
    %1997 = vmatprep.subr.bf16.mxu0 0
    %1998 = vmatpush1.bf16.msra.mxu0 %v1989
    %1999 = vmatprep.subr.bf16.mxu0 0
    %2000 = vmatpush1.bf16.msra.mxu0 0
    %2001 = vmatprep.subr.bf16.mxu0 0
    %2002 = vmatpush1.bf16.msra.mxu0 0
    %2003 = vmatprep.subr.bf16.mxu0 0
    %2004 = vmatpush1.bf16.msra.mxu0 0
    %2005 = vmatprep.subr.bf16.mxu0 0
    %2006 = vmatpush1.bf16.msra.mxu0 0
    %2007 = vmatprep.subr.bf16.mxu0 0
    %2008 = vmatpush1.bf16.msra.mxu0 0
    %2009 = vmatprep.subr.bf16.mxu0 0
    %2010 = vmatpush1.bf16.msra.mxu0 0
    %2011 = vmatprep.subr.bf16.mxu0 0
    %2012 = vmatpush1.bf16.msra.mxu0 0
    %2013 = vmatprep.subr.bf16.mxu0 0
    %2014 = vmatpush1.bf16.msra.mxu0 0
    %2015 = vmatprep.subr.bf16.mxu0 0
    %2016 = vmatpush1.bf16.msra.mxu0 0
    %2017 = vmatprep.subr.bf16.mxu0 0
    %2018 = vmatpush1.bf16.msra.mxu0 0
    %2019 = vmatprep.subr.bf16.mxu0 0
    %2020 = vmatpush1.bf16.msra.mxu0 0
    %2021 = vmatprep.subr.bf16.mxu0 0
    %2022 = vmatpush1.bf16.msra.mxu0 0
    %2023 = vmatprep.subr.bf16.mxu0 0
    %2024 = vmatpush1.bf16.msra.mxu0 0
    %2025 = vmatprep.subr.bf16.mxu0 0
    %2026 = vmatpush1.bf16.msra.mxu0 0
    %2027 = vmatprep.mubr.bf16.mxu0 0
    %2028 = vmatmul.mubr.bf16.gmra.mrb[0].mxu0 %v1993
    %v2029 = vpop.f32.mrb[0].mxu0
    %v2030 = vadd.f32 %v1979, %v2029
    %v2031 = vpop.f32.mrb[0].mxu0
    %v2032 = vpop.f32.mrb[0].mxu0
    %v2033 = vpop.f32.mrb[0].mxu0
    %2034 = vdwg.mxu0
    %v2035 = vtanh.pop %v2030
    %vm2036 = vcmask 254976
    %2037 = vst.msk [vmem:[#allocation5] sm:$0x3] %vm2036, %v2035
    %v2038 = vpack.c.bf16 %v2035, %v2035
    %v2039 = vld [vmem:[%s6] sm:$0xf]
    %v2040 = vld [vmem:[%s6 + $0x4] sm:$0xf]
    %v2041 = vld [vmem:[%s6 + $0x8] sm:$0xf]
    %v2042 = vld [vmem:[%s6 + $0xc] sm:$0xf]
    %v2047 = vunpack.c.l.b16 %v2039
    %v2048 = vunpack.c.l.b16 %v2040
    %v2049 = vunpack.c.l.b16 %v2041
    %v2050 = vunpack.c.l.b16 %v2042
    %v2051 = vpack.c.b16 %v2048, %v2047
    %v2052 = vpack.c.b16 %v2050, %v2049
    %v2056 = vsel %vm41, %v2038, 0
    %2058 = vmatprep.subr.bf16.mxu0 0
    %2059 = vmatpush1.bf16.msra.mxu0 %v2051
    %2060 = vmatprep.subr.bf16.mxu0 0
    %2061 = vmatpush1.bf16.msra.mxu0 %v2052
    %2062 = vmatprep.subr.bf16.mxu0 0
    %2063 = vmatpush1.bf16.msra.mxu0 0
    %2064 = vmatprep.subr.bf16.mxu0 0
    %2065 = vmatpush1.bf16.msra.mxu0 0
    %2066 = vmatprep.subr.bf16.mxu0 0
    %2067 = vmatpush1.bf16.msra.mxu0 0
    %2068 = vmatprep.subr.bf16.mxu0 0
    %2069 = vmatpush1.bf16.msra.mxu0 0
    %2070 = vmatprep.subr.bf16.mxu0 0
    %2071 = vmatpush1.bf16.msra.mxu0 0
    %2072 = vmatprep.subr.bf16.mxu0 0
    %2073 = vmatpush1.bf16.msra.mxu0 0
    %2074 = vmatprep.subr.bf16.mxu0 0
    %2075 = vmatpush1.bf16.msra.mxu0 0
    %2076 = vmatprep.subr.bf16.mxu0 0
    %2077 = vmatpush1.bf16.msra.mxu0 0
    %2078 = vmatprep.subr.bf16.mxu0 0
    %2079 = vmatpush1.bf16.msra.mxu0 0
    %2080 = vmatprep.subr.bf16.mxu0 0
    %2081 = vmatpush1.bf16.msra.mxu0 0
    %2082 = vmatprep.subr.bf16.mxu0 0
    %2083 = vmatpush1.bf16.msra.mxu0 0
    %2084 = vmatprep.subr.bf16.mxu0 0
    %2085 = vmatpush1.bf16.msra.mxu0 0
    %2086 = vmatprep.subr.bf16.mxu0 0
    %2087 = vmatpush1.bf16.msra.mxu0 0
    %2088 = vmatprep.subr.bf16.mxu0 0
    %2089 = vmatpush1.bf16.msra.mxu0 0
    %2090 = vmatprep.mubr.bf16.mxu0 0
    %2091 = vmatmul.mubr.bf16.gmra.mrb[0].mxu0 %v2056
    %v2092 = vpop.f32.mrb[0].mxu0
    %v2093 = vadd.f32 0.0, %v2092
    %v2094 = vpop.f32.mrb[0].mxu0
    %v2095 = vpop.f32.mrb[0].mxu0
    %v2096 = vpop.f32.mrb[0].mxu0
    %2097 = vdwg.mxu0
    %v2098 = vld [vmem:[%s7 + $0x3] sm:$0x1]
    %v2099 = vlaneseq
    %v2100 = vshrl.u32 %v2099, 7
    %v2101 = vsub.s32 0, %v2100
    %v2102 = vrot.slane %v2098, %v2101
    %v2103 = vadd.f32 %v2093, %v2102
    %vm2104 = vcmask 17408
    %2105 = vst.msk [vmem:[#allocation7] sm:$0x3] %vm2104, %v2103
    // Predicated region
    $region34: #{san_bert_forward.1} parent=1 // pred_check
      _
    $region35: #{san_bert_forward.1} parent=1 // pred_check_branch
      %2107 = sbr.rel (0) target = $region37
    $region36: #{san_bert_forward.1} parent=1 // pred_region
      %s2109 = ssub.s32 256, 256
      %2110 = vsyncadd [#allocation4], %s2109
      %s2111 = sshll.u32 [#allocation3], 4
      %s2112 = int_to_ptr.vmem [resolvable:$true] %s2111
      %2117 = dma.vmem_to_hbm [thread:$0]  %s2112, 256, %s8, [#allocation4], 128, 128, 8
    $region37: #{san_bert_forward.1} parent=1 // pred_fallthru
      _
    // Predicated region
    $region38: #{san_bert_forward.1} parent=1 // pred_check
      _
    $region39: #{san_bert_forward.1} parent=1 // pred_check_branch
      %2119 = sbr.rel (0) target = $region41
    $region40: #{san_bert_forward.1} parent=1 // pred_region
      %s2121 = ssub.s32 32, 32
      %2122 = vsyncadd [#allocation6], %s2121
      %s2124 = sshll.u32 [#allocation5], 4
      %s2125 = int_to_ptr.vmem [resolvable:$true] %s2124
      %2127 = dma.vmem_to_hbm [thread:$0]  %s2125, 32, %s9, [#allocation6]
    $region41: #{san_bert_forward.1} parent=1 // pred_fallthru
      _
    // Predicated region
    $region42: #{san_bert_forward.1} parent=1 // pred_check
      _
    $region43: #{san_bert_forward.1} parent=1 // pred_check_branch
      %2129 = sbr.rel (0) target = $region45
    $region44: #{san_bert_forward.1} parent=1 // pred_region
      %s2131 = ssub.s32 32, 32
      %2132 = vsyncadd [#allocation6], %s2131
      %s2134 = sshll.u32 [#allocation7], 4
      %s2135 = int_to_ptr.vmem [resolvable:$true] %s2134
      %2137 = dma.vmem_to_hbm [thread:$0]  %s2135, 32, %s10, [#allocation6]
    $region45: #{san_bert_forward.1} parent=1 // pred_fallthru
      _
    // Predicated region
    $region46: #{san_bert_forward.1} parent=1 // pred_check
      _
    $region47: #{san_bert_forward.1} parent=1 // pred_check_branch
      %2139 = sbr.rel (0) target = $region49
    $region48: #{san_bert_forward.1} parent=1 // pred_region
      %2140 = dma.done [#allocation4], 256
    $region49: #{san_bert_forward.1} parent=1 // pred_fallthru
      _
    // Predicated region
    $region50: #{san_bert_forward.1} parent=1 // pred_check
      _
    $region51: #{san_bert_forward.1} parent=1 // pred_check_branch
      %2142 = sbr.rel (0) target = $region53
    $region52: #{san_bert_forward.1} parent=1 // pred_region
      %2143 = dma.done [#allocation6], 32
    $region53: #{san_bert_forward.1} parent=1 // pred_fallthru
      _
    // Predicated region
    $region54: #{san_bert_forward.1} parent=1 // pred_check
      _
    $region55: #{san_bert_forward.1} parent=1 // pred_check_branch
      %2145 = sbr.rel (0) target = $region57
    $region56: #{san_bert_forward.1} parent=1 // pred_region
      %2146 = dma.done [#allocation6], 32
    $region57: #{san_bert_forward.1} parent=1 // pred_fallthru
      _
    %2147 = vsyncpa [#allocation4], 1
    %2148 = vsyncpa [#allocation6], 1

</llo_original>
